<compile_context>
chip_gen: v5e
topology: v5e:2x2
jax: 0.10.0
libtpu: 0.0.40
codegen_flags: <defaults>
</compile_context>

<pallas_src>
import numpy as np
import jax
import jax.numpy as jnp
from jax.experimental import pallas as pl
from jax.experimental.pallas import tpu as pltpu


LAYER_CFG = [  # (in_channels, out_channels, filter_size, stride)
    (3, 8, 3, 1),
    (8, 16, 3, 2),
    (16, 32, 3, 2),
    (32, 64, 3, 2),
]
PAD = 1
K = 3
B_BLK = 16  # batch block (review: 8-32); 16 = bf16 sublane tile -> aligned reshapes


def _out_size(n, k, s):
    return (n + 2 * PAD - k) // s + 1


def _layer_dims(H, W):
    dims = []
    h, w = H, W
    for (ci, co, k, s) in LAYER_CFG:
        ho, wo = _out_size(h, k, s), _out_size(w, k, s)
        dims.append(dict(Hi=h, Wi=w, Ci=ci, Ho=ho, Wo=wo, Co=co, s=s))
        h, w = ho, wo
    return dims


def _expanded_weight(w_hwio, Wi, Wo, s):
    """(K,K,Ci,Co) conv weight -> (K*Wi*Ci, Wo*Co) bf16 matrix.

    Row index = kh*(Wi*Ci) + w*Ci + ci, col index = j*Co + co, entry =
    W[kh,kw,ci,co] iff w == s*j + kw - PAD (horizontal padding & stride folded in)."""
    Kh, Kw, Ci, Co = w_hwio.shape
    S = np.zeros((Kw, Wi, Wo), np.float32)
    for kw in range(Kw):
        for j in range(Wo):
            wcol = s * j + kw - PAD
            if 0 <= wcol < Wi:
                S[kw, wcol, j] = 1.0
    wm = jnp.einsum("kwj,hkio->hwijo", jnp.asarray(S), w_hwio)
    return wm.reshape(Kh * Wi * Ci, Wo * Co).astype(jnp.bfloat16)


def _make_kernel(dims, batch_blk):
    n_layers = len(dims)

    def kernel(*refs):
        x_ref = refs[0]
        w_refs = [refs[1 + 2 * l] for l in range(n_layers)]
        b_refs = [refs[2 + 2 * l] for l in range(n_layers)]
        o_ref = refs[1 + 2 * n_layers]

        B = batch_blk
        x = x_ref[...]  # (Hi0, B, Wi0*Ci0) bf16, lane index = w*Ci + ci
        for l, d in enumerate(dims):
            Hi, Wi, Ci = d["Hi"], d["Wi"], d["Ci"]
            Ho, Wo, Co, s = d["Ho"], d["Wo"], d["Co"], d["s"]
            # Vertical zero halo (horizontal halo is folded into the weight matrix).
            hp = (Ho + 2) if s == 1 else (2 * Ho + 2)
            pad_bot = hp - 1 - Hi
            zrow = jnp.zeros((1, B, Wi * Ci), x.dtype)
            xp = jnp.concatenate([zrow, x] + [zrow] * pad_bot, axis=0)  # (hp, B, Wi*Ci)

            # The three kh row-taps; stride-2 uses a leading-dim slab reshape
            # (no strided / masked sublane access).
            if s == 1:
                taps = [xp[kh:kh + Ho] for kh in range(K)]
            else:
                lo = xp[0:2 * Ho].reshape(Ho, 2, B, Wi * Ci)
                hi = xp[2:2 * Ho + 2].reshape(Ho, 2, B, Wi * Ci)
                taps = [lo[:, 0], lo[:, 1], hi[:, 0]]

            patch = jnp.concatenate(taps, axis=-1)          # (Ho, B, K*Wi*Ci)
            patch = patch.reshape(Ho * B, K * Wi * Ci)      # tile-aligned merge (B=16)
            acc = jnp.dot(patch, w_refs[l][...],
                          preferred_element_type=jnp.float32)  # (Ho*B, Wo*Co)
            h = jnp.maximum(acc + b_refs[l][...], 0.0)         # bias f32, ReLU f32
            if l == n_layers - 1:
                o_ref[...] = h.reshape(Ho, B, Wo * Co)         # lane-dense f32 output
            else:
                x = h.astype(jnp.bfloat16).reshape(Ho, B, Wo * Co)

    return kernel


@jax.jit
def feature_extract(x_nchw, weights, biases):
    """NCHW f32 input -> NCHW f32 output; all 4 conv blocks in one Pallas kernel."""
    N, Cin, H, W = x_nchw.shape
    dims = _layer_dims(H, W)
    HL, WL, CL = dims[-1]["Ho"], dims[-1]["Wo"], dims[-1]["Co"]

    # NCHW -> (H, N, W*C) lane-dense activation layout, bf16 operands (matches reference
    # quantization).
    xk = jnp.transpose(x_nchw, (2, 0, 3, 1)).reshape(H, N, W * Cin).astype(jnp.bfloat16)
    n_pad = ((N + B_BLK - 1) // B_BLK) * B_BLK
    if n_pad != N:
        xk = jnp.pad(xk, ((0, 0), (0, n_pad - N), (0, 0)))

    inputs = [xk]
    in_specs = [pl.BlockSpec((H, B_BLK, W * Cin), lambda n: (0, n, 0))]
    for l, d in enumerate(dims):
        wm = _expanded_weight(weights[l], d["Wi"], d["Wo"], d["s"])
        bm = jnp.tile(biases[l], d["Wo"]).reshape(1, d["Wo"] * d["Co"]).astype(jnp.float32)
        inputs += [wm, bm]
        in_specs += [pl.BlockSpec(wm.shape, lambda n: (0, 0)),
                     pl.BlockSpec(bm.shape, lambda n: (0, 0))]

    out = pl.pallas_call(
        _make_kernel(dims, B_BLK),
        out_shape=jax.ShapeDtypeStruct((HL, n_pad, WL * CL), jnp.float32),
        grid=(n_pad // B_BLK,),
        in_specs=in_specs,
        out_specs=pl.BlockSpec((HL, B_BLK, WL * CL), lambda n: (0, n, 0)),
        compiler_params=pltpu.CompilerParams(dimension_semantics=("parallel",)),
    )(*inputs)

    # (HL, n_pad, WL*CL) -> NCHW, drop batch padding.
    out = out.reshape(HL, n_pad, WL, CL)
    return jnp.transpose(out, (1, 3, 0, 2))[:N]


def feature_extract_reference(x_nchw, weights, biases):
    """Pure-JAX reference with identical bf16 operand quantization."""
    x = jnp.transpose(x_nchw, (0, 2, 3, 1)).astype(jnp.bfloat16)
    y = None
    for (w, b, cfg) in zip(weights, biases, LAYER_CFG):
        stride = cfg[3]
        y = jax.lax.conv_general_dilated(
            x, w.astype(jnp.bfloat16),
            window_strides=(stride, stride),
            padding=((PAD, PAD), (PAD, PAD)),
            dimension_numbers=("NHWC", "HWIO", "NHWC"),
            preferred_element_type=jnp.float32)
        y = jnp.maximum(y + b.astype(jnp.float32), 0.0)
        x = y.astype(jnp.bfloat16)
    return jnp.transpose(y, (0, 3, 1, 2))


def init_params(key):
    weights, biases = [], []
    for (cin, cout, k, _stride) in LAYER_CFG:
        key, wk, bk = jax.random.split(key, 3)
        fan_in = cin * k * k
        w = jax.random.normal(wk, (k, k, cin, cout), jnp.float32) * (2.0 / fan_in) ** 0.5
        b = jax.random.normal(bk, (cout,), jnp.float32) * 0.01
        weights.append(w)
        biases.append(b)
    return tuple(weights), tuple(biases)


if __name__ == "__main__":
    key = jax.random.PRNGKey(0)
    pkey, xkey = jax.random.split(key)
    weights, biases = init_params(pkey)

    # Small 3-channel "stft image" input, NCHW (PyTorch convention).
    x = jax.random.normal(xkey, (2, 3, 16, 16), jnp.float32)

    out = feature_extract(x, weights, biases)
    out = jax.block_until_ready(out)

    assert out.shape == (2, 64, 2, 2), out.shape
    assert bool(jnp.all(jnp.isfinite(out)))
    assert bool(jnp.all(out >= 0.0))  # ReLU output

    ref = feature_extract_reference(x, weights, biases)
    max_err = float(jnp.max(jnp.abs(out - ref)))
    assert bool(jnp.allclose(out, ref, atol=5e-2, rtol=5e-2)), max_err

    print("KERNEL_OK")
</pallas_src>

<mosaic_0001>
module attributes {stable_mosaic.version = 11 : i64} {
  func.func @kernel(%arg0: i32, %arg1: memref<16x16x48xbf16, #tpu.memory_space<vmem>>, %arg2: memref<144x128xbf16, #tpu.memory_space<vmem>>, %arg3: memref<1x128xf32, #tpu.memory_space<vmem>>, %arg4: memref<384x128xbf16, #tpu.memory_space<vmem>>, %arg5: memref<1x128xf32, #tpu.memory_space<vmem>>, %arg6: memref<384x128xbf16, #tpu.memory_space<vmem>>, %arg7: memref<1x128xf32, #tpu.memory_space<vmem>>, %arg8: memref<384x128xbf16, #tpu.memory_space<vmem>>, %arg9: memref<1x128xf32, #tpu.memory_space<vmem>>, %arg10: memref<2x16x128xf32, #tpu.memory_space<vmem>>) attributes {dimension_semantics = [#tpu.dimension_semantics<parallel>], iteration_bounds = array<i64: 1>, scalar_prefetch = 0 : i64, scratch_operands = 0 : i64, tpu.core_type = #tpu.core_type<tc>, window_params = [{transform_indices = @transform_0, window_bounds = array<i64: 16, 16, 48>}, {pipeline_mode = #tpu.pipeline_mode<synchronous>, transform_indices = @transform_1, window_bounds = array<i64: 144, 128>}, {pipeline_mode = #tpu.pipeline_mode<synchronous>, transform_indices = @transform_2, window_bounds = array<i64: 1, 128>}, {pipeline_mode = #tpu.pipeline_mode<synchronous>, transform_indices = @transform_3, window_bounds = array<i64: 384, 128>}, {pipeline_mode = #tpu.pipeline_mode<synchronous>, transform_indices = @transform_4, window_bounds = array<i64: 1, 128>}, {pipeline_mode = #tpu.pipeline_mode<synchronous>, transform_indices = @transform_5, window_bounds = array<i64: 384, 128>}, {pipeline_mode = #tpu.pipeline_mode<synchronous>, transform_indices = @transform_6, window_bounds = array<i64: 1, 128>}, {pipeline_mode = #tpu.pipeline_mode<synchronous>, transform_indices = @transform_7, window_bounds = array<i64: 384, 128>}, {pipeline_mode = #tpu.pipeline_mode<synchronous>, transform_indices = @transform_8, window_bounds = array<i64: 1, 128>}, {transform_indices = @transform_9, window_bounds = array<i64: 2, 16, 128>}]} {
    %c0 = arith.constant 0 : index
    %c0_0 = arith.constant 0 : index
    %c0_1 = arith.constant 0 : index
    %0 = vector.load %arg1[%c0, %c0_0, %c0_1] : memref<16x16x48xbf16, #tpu.memory_space<vmem>>, vector<16x16x48xbf16>
    %cst = arith.constant 0.000000e+00 : bf16
    %1 = vector.broadcast %cst : bf16 to vector<1x16x48xbf16>
    %2 = tpu.concatenate %1, %0, %1 in 0 : vector<1x16x48xbf16>, vector<16x16x48xbf16>, vector<1x16x48xbf16> -> vector<18x16x48xbf16>
    %3 = vector.extract_strided_slice %2 {offsets = [0, 0, 0], sizes = [16, 16, 48], strides = [1, 1, 1]} : vector<18x16x48xbf16> to vector<16x16x48xbf16>
    %4 = vector.extract_strided_slice %2 {offsets = [1, 0, 0], sizes = [16, 16, 48], strides = [1, 1, 1]} : vector<18x16x48xbf16> to vector<16x16x48xbf16>
    %5 = vector.extract_strided_slice %2 {offsets = [2, 0, 0], sizes = [16, 16, 48], strides = [1, 1, 1]} : vector<18x16x48xbf16> to vector<16x16x48xbf16>
    %6 = tpu.concatenate %3, %4, %5 in 2 : vector<16x16x48xbf16>, vector<16x16x48xbf16>, vector<16x16x48xbf16> -> vector<16x16x144xbf16>
    %7 = vector.shape_cast %6 : vector<16x16x144xbf16> to vector<256x144xbf16>
    %c0_2 = arith.constant 0 : index
    %c0_3 = arith.constant 0 : index
    %8 = vector.load %arg2[%c0_2, %c0_3] : memref<144x128xbf16, #tpu.memory_space<vmem>>, vector<144x128xbf16>
    %cst_4 = arith.constant dense<0.000000e+00> : vector<256x128xf32>
    %9 = tpu.matmul %7, %8, %cst_4 {dimension_numbers = #tpu.dot_dimension_numbers<[1], [0], [0], [1], [0, 0, 1, 1], [], []>} : vector<256x144xbf16>, vector<144x128xbf16>, vector<256x128xf32> -> vector<256x128xf32>
    %c0_5 = arith.constant 0 : index
    %c0_6 = arith.constant 0 : index
    %10 = vector.load %arg3[%c0_5, %c0_6] : memref<1x128xf32, #tpu.memory_space<vmem>>, vector<1x128xf32>
    %11 = vector.broadcast %10 : vector<1x128xf32> to vector<256x128xf32>
    %12 = arith.addf %9, %11 : vector<256x128xf32>
    %cst_7 = arith.constant 0.000000e+00 : f32
    %13 = vector.broadcast %cst_7 : f32 to vector<256x128xf32>
    %14 = arith.maximumf %12, %13 : vector<256x128xf32>
    %15 = arith.truncf %14 : vector<256x128xf32> to vector<256x128xbf16>
    %16 = vector.shape_cast %15 : vector<256x128xbf16> to vector<16x16x128xbf16>
    %cst_8 = arith.constant 0.000000e+00 : bf16
    %17 = vector.broadcast %cst_8 : bf16 to vector<1x16x128xbf16>
    %18 = tpu.concatenate %17, %16, %17 in 0 : vector<1x16x128xbf16>, vector<16x16x128xbf16>, vector<1x16x128xbf16> -> vector<18x16x128xbf16>
    %19 = vector.extract_strided_slice %18 {offsets = [0, 0, 0], sizes = [16, 16, 128], strides = [1, 1, 1]} : vector<18x16x128xbf16> to vector<16x16x128xbf16>
    %20 = vector.shape_cast %19 : vector<16x16x128xbf16> to vector<8x2x16x128xbf16>
    %21 = vector.extract_strided_slice %18 {offsets = [2, 0, 0], sizes = [16, 16, 128], strides = [1, 1, 1]} : vector<18x16x128xbf16> to vector<16x16x128xbf16>
    %22 = vector.shape_cast %21 : vector<16x16x128xbf16> to vector<8x2x16x128xbf16>
    %23 = vector.extract_strided_slice %20 {offsets = [0, 0, 0, 0], sizes = [8, 1, 16, 128], strides = [1, 1, 1, 1]} : vector<8x2x16x128xbf16> to vector<8x1x16x128xbf16>
    %24 = vector.shape_cast %23 : vector<8x1x16x128xbf16> to vector<8x16x128xbf16>
    %25 = vector.extract_strided_slice %20 {offsets = [0, 1, 0, 0], sizes = [8, 1, 16, 128], strides = [1, 1, 1, 1]} : vector<8x2x16x128xbf16> to vector<8x1x16x128xbf16>
    %26 = vector.shape_cast %25 : vector<8x1x16x128xbf16> to vector<8x16x128xbf16>
    %27 = vector.extract_strided_slice %22 {offsets = [0, 0, 0, 0], sizes = [8, 1, 16, 128], strides = [1, 1, 1, 1]} : vector<8x2x16x128xbf16> to vector<8x1x16x128xbf16>
    %28 = vector.shape_cast %27 : vector<8x1x16x128xbf16> to vector<8x16x128xbf16>
    %29 = tpu.concatenate %24, %26, %28 in 2 : vector<8x16x128xbf16>, vector<8x16x128xbf16>, vector<8x16x128xbf16> -> vector<8x16x384xbf16>
    %30 = vector.shape_cast %29 : vector<8x16x384xbf16> to vector<128x384xbf16>
    %c0_9 = arith.constant 0 : index
    %c0_10 = arith.constant 0 : index
    %31 = vector.load %arg4[%c0_9, %c0_10] : memref<384x128xbf16, #tpu.memory_space<vmem>>, vector<384x128xbf16>
    %cst_11 = arith.constant dense<0.000000e+00> : vector<128x128xf32>
    %32 = tpu.matmul %30, %31, %cst_11 {dimension_numbers = #tpu.dot_dimension_numbers<[1], [0], [0], [1], [0, 0, 1, 1], [], []>} : vector<128x384xbf16>, vector<384x128xbf16>, vector<128x128xf32> -> vector<128x128xf32>
    %c0_12 = arith.constant 0 : index
    %c0_13 = arith.constant 0 : index
    %33 = vector.load %arg5[%c0_12, %c0_13] : memref<1x128xf32, #tpu.memory_space<vmem>>, vector<1x128xf32>
    %34 = vector.broadcast %33 : vector<1x128xf32> to vector<128x128xf32>
    %35 = arith.addf %32, %34 : vector<128x128xf32>
    %cst_14 = arith.constant 0.000000e+00 : f32
    %36 = vector.broadcast %cst_14 : f32 to vector<128x128xf32>
    %37 = arith.maximumf %35, %36 : vector<128x128xf32>
    %38 = arith.truncf %37 : vector<128x128xf32> to vector<128x128xbf16>
    %39 = vector.shape_cast %38 : vector<128x128xbf16> to vector<8x16x128xbf16>
    %cst_15 = arith.constant 0.000000e+00 : bf16
    %40 = vector.broadcast %cst_15 : bf16 to vector<1x16x128xbf16>
    %41 = tpu.concatenate %40, %39, %40 in 0 : vector<1x16x128xbf16>, vector<8x16x128xbf16>, vector<1x16x128xbf16> -> vector<10x16x128xbf16>
    %42 = vector.extract_strided_slice %41 {offsets = [0, 0, 0], sizes = [8, 16, 128], strides = [1, 1, 1]} : vector<10x16x128xbf16> to vector<8x16x128xbf16>
    %43 = vector.shape_cast %42 : vector<8x16x128xbf16> to vector<4x2x16x128xbf16>
    %44 = vector.extract_strided_slice %41 {offsets = [2, 0, 0], sizes = [8, 16, 128], strides = [1, 1, 1]} : vector<10x16x128xbf16> to vector<8x16x128xbf16>
    %45 = vector.shape_cast %44 : vector<8x16x128xbf16> to vector<4x2x16x128xbf16>
    %46 = vector.extract_strided_slice %43 {offsets = [0, 0, 0, 0], sizes = [4, 1, 16, 128], strides = [1, 1, 1, 1]} : vector<4x2x16x128xbf16> to vector<4x1x16x128xbf16>
    %47 = vector.shape_cast %46 : vector<4x1x16x128xbf16> to vector<4x16x128xbf16>
    %48 = vector.extract_strided_slice %43 {offsets = [0, 1, 0, 0], sizes = [4, 1, 16, 128], strides = [1, 1, 1, 1]} : vector<4x2x16x128xbf16> to vector<4x1x16x128xbf16>
    %49 = vector.shape_cast %48 : vector<4x1x16x128xbf16> to vector<4x16x128xbf16>
    %50 = vector.extract_strided_slice %45 {offsets = [0, 0, 0, 0], sizes = [4, 1, 16, 128], strides = [1, 1, 1, 1]} : vector<4x2x16x128xbf16> to vector<4x1x16x128xbf16>
    %51 = vector.shape_cast %50 : vector<4x1x16x128xbf16> to vector<4x16x128xbf16>
    %52 = tpu.concatenate %47, %49, %51 in 2 : vector<4x16x128xbf16>, vector<4x16x128xbf16>, vector<4x16x128xbf16> -> vector<4x16x384xbf16>
    %53 = vector.shape_cast %52 : vector<4x16x384xbf16> to vector<64x384xbf16>
    %c0_16 = arith.constant 0 : index
    %c0_17 = arith.constant 0 : index
    %54 = vector.load %arg6[%c0_16, %c0_17] : memref<384x128xbf16, #tpu.memory_space<vmem>>, vector<384x128xbf16>
    %cst_18 = arith.constant dense<0.000000e+00> : vector<64x128xf32>
    %55 = tpu.matmul %53, %54, %cst_18 {dimension_numbers = #tpu.dot_dimension_numbers<[1], [0], [0], [1], [0, 0, 1, 1], [], []>} : vector<64x384xbf16>, vector<384x128xbf16>, vector<64x128xf32> -> vector<64x128xf32>
    %c0_19 = arith.constant 0 : index
    %c0_20 = arith.constant 0 : index
    %56 = vector.load %arg7[%c0_19, %c0_20] : memref<1x128xf32, #tpu.memory_space<vmem>>, vector<1x128xf32>
    %57 = vector.broadcast %56 : vector<1x128xf32> to vector<64x128xf32>
    %58 = arith.addf %55, %57 : vector<64x128xf32>
    %cst_21 = arith.constant 0.000000e+00 : f32
    %59 = vector.broadcast %cst_21 : f32 to vector<64x128xf32>
    %60 = arith.maximumf %58, %59 : vector<64x128xf32>
    %61 = arith.truncf %60 : vector<64x128xf32> to vector<64x128xbf16>
    %62 = vector.shape_cast %61 : vector<64x128xbf16> to vector<4x16x128xbf16>
    %cst_22 = arith.constant 0.000000e+00 : bf16
    %63 = vector.broadcast %cst_22 : bf16 to vector<1x16x128xbf16>
    %64 = tpu.concatenate %63, %62, %63 in 0 : vector<1x16x128xbf16>, vector<4x16x128xbf16>, vector<1x16x128xbf16> -> vector<6x16x128xbf16>
    %65 = vector.extract_strided_slice %64 {offsets = [0, 0, 0], sizes = [4, 16, 128], strides = [1, 1, 1]} : vector<6x16x128xbf16> to vector<4x16x128xbf16>
    %66 = vector.shape_cast %65 : vector<4x16x128xbf16> to vector<2x2x16x128xbf16>
    %67 = vector.extract_strided_slice %64 {offsets = [2, 0, 0], sizes = [4, 16, 128], strides = [1, 1, 1]} : vector<6x16x128xbf16> to vector<4x16x128xbf16>
    %68 = vector.shape_cast %67 : vector<4x16x128xbf16> to vector<2x2x16x128xbf16>
    %69 = vector.extract_strided_slice %66 {offsets = [0, 0, 0, 0], sizes = [2, 1, 16, 128], strides = [1, 1, 1, 1]} : vector<2x2x16x128xbf16> to vector<2x1x16x128xbf16>
    %70 = vector.shape_cast %69 : vector<2x1x16x128xbf16> to vector<2x16x128xbf16>
    %71 = vector.extract_strided_slice %66 {offsets = [0, 1, 0, 0], sizes = [2, 1, 16, 128], strides = [1, 1, 1, 1]} : vector<2x2x16x128xbf16> to vector<2x1x16x128xbf16>
    %72 = vector.shape_cast %71 : vector<2x1x16x128xbf16> to vector<2x16x128xbf16>
    %73 = vector.extract_strided_slice %68 {offsets = [0, 0, 0, 0], sizes = [2, 1, 16, 128], strides = [1, 1, 1, 1]} : vector<2x2x16x128xbf16> to vector<2x1x16x128xbf16>
    %74 = vector.shape_cast %73 : vector<2x1x16x128xbf16> to vector<2x16x128xbf16>
    %75 = tpu.concatenate %70, %72, %74 in 2 : vector<2x16x128xbf16>, vector<2x16x128xbf16>, vector<2x16x128xbf16> -> vector<2x16x384xbf16>
    %76 = vector.shape_cast %75 : vector<2x16x384xbf16> to vector<32x384xbf16>
    %c0_23 = arith.constant 0 : index
    %c0_24 = arith.constant 0 : index
    %77 = vector.load %arg8[%c0_23, %c0_24] : memref<384x128xbf16, #tpu.memory_space<vmem>>, vector<384x128xbf16>
    %cst_25 = arith.constant dense<0.000000e+00> : vector<32x128xf32>
    %78 = tpu.matmul %76, %77, %cst_25 {dimension_numbers = #tpu.dot_dimension_numbers<[1], [0], [0], [1], [0, 0, 1, 1], [], []>} : vector<32x384xbf16>, vector<384x128xbf16>, vector<32x128xf32> -> vector<32x128xf32>
    %c0_26 = arith.constant 0 : index
    %c0_27 = arith.constant 0 : index
    %79 = vector.load %arg9[%c0_26, %c0_27] : memref<1x128xf32, #tpu.memory_space<vmem>>, vector<1x128xf32>
    %80 = vector.broadcast %79 : vector<1x128xf32> to vector<32x128xf32>
    %81 = arith.addf %78, %80 : vector<32x128xf32>
    %cst_28 = arith.constant 0.000000e+00 : f32
    %82 = vector.broadcast %cst_28 : f32 to vector<32x128xf32>
    %83 = arith.maximumf %81, %82 : vector<32x128xf32>
    %84 = vector.shape_cast %83 : vector<32x128xf32> to vector<2x16x128xf32>
    %c0_29 = arith.constant 0 : index
    %c0_30 = arith.constant 0 : index
    %c0_31 = arith.constant 0 : index
    %85 = vector.load %arg10[%c0_29, %c0_30, %c0_31] : memref<2x16x128xf32, #tpu.memory_space<vmem>>, vector<2x16x128xf32>
    tpu.vector_store %arg10[%c0_29, %c0_30, %c0_31], %84 {strides = array<i32>} : memref<2x16x128xf32, #tpu.memory_space<vmem>>, vector<2x16x128xf32>,
    return
  }
  func.func @transform_0(%arg0: i32) -> (i32, i32, i32) {
    %c0_i32 = arith.constant 0 : i32
    %c0_i32_0 = arith.constant 0 : i32
    %c0_i32_1 = arith.constant 0 : i32
    return %c0_i32, %arg0, %c0_i32_0 : i32, i32, i32
  }
  func.func @transform_1(%arg0: i32) -> (i32, i32) {
    %c0_i32 = arith.constant 0 : i32
    %c0_i32_0 = arith.constant 0 : i32
    %c0_i32_1 = arith.constant 0 : i32
    return %c0_i32, %c0_i32_0 : i32, i32
  }
  func.func @transform_2(%arg0: i32) -> (i32, i32) {
    %c0_i32 = arith.constant 0 : i32
    %c0_i32_0 = arith.constant 0 : i32
    %c0_i32_1 = arith.constant 0 : i32
    return %c0_i32, %c0_i32_0 : i32, i32
  }
  func.func @transform_3(%arg0: i32) -> (i32, i32) {
    %c0_i32 = arith.constant 0 : i32
    %c0_i32_0 = arith.constant 0 : i32
    %c0_i32_1 = arith.constant 0 : i32
    return %c0_i32, %c0_i32_0 : i32, i32
  }
  func.func @transform_4(%arg0: i32) -> (i32, i32) {
    %c0_i32 = arith.constant 0 : i32
    %c0_i32_0 = arith.constant 0 : i32
    %c0_i32_1 = arith.constant 0 : i32
    return %c0_i32, %c0_i32_0 : i32, i32
  }
  func.func @transform_5(%arg0: i32) -> (i32, i32) {
    %c0_i32 = arith.constant 0 : i32
    %c0_i32_0 = arith.constant 0 : i32
    %c0_i32_1 = arith.constant 0 : i32
    return %c0_i32, %c0_i32_0 : i32, i32
  }
  func.func @transform_6(%arg0: i32) -> (i32, i32) {
    %c0_i32 = arith.constant 0 : i32
    %c0_i32_0 = arith.constant 0 : i32
    %c0_i32_1 = arith.constant 0 : i32
    return %c0_i32, %c0_i32_0 : i32, i32
  }
  func.func @transform_7(%arg0: i32) -> (i32, i32) {
    %c0_i32 = arith.constant 0 : i32
    %c0_i32_0 = arith.constant 0 : i32
    %c0_i32_1 = arith.constant 0 : i32
    return %c0_i32, %c0_i32_0 : i32, i32
  }
  func.func @transform_8(%arg0: i32) -> (i32, i32) {
    %c0_i32 = arith.constant 0 : i32
    %c0_i32_0 = arith.constant 0 : i32
    %c0_i32_1 = arith.constant 0 : i32
    return %c0_i32, %c0_i32_0 : i32, i32
  }
  func.func @transform_9(%arg0: i32) -> (i32, i32, i32) {
    %c0_i32 = arith.constant 0 : i32
    %c0_i32_0 = arith.constant 0 : i32
    %c0_i32_1 = arith.constant 0 : i32
    return %c0_i32, %arg0, %c0_i32_0 : i32, i32, i32
  }
}

</mosaic_0001>

<llo_original>
// kernel: tile.23
$region0: #{tile.23}
  #allocation0 [shape = 's32[1]{0}', space=sflag, size = 0x4, scoped, tag = 'scoped memory for tile.23']
  %s0 = inlined_call_operand.vmem [shape: f32[8], index: 0, kind: input, shape index: {}]
  %s1 = inlined_call_operand.vmem [shape: f32[16,8], index: 1, kind: output, shape index: {}]
  // Predicated region
  $region2: #{tile.23} parent=0 // pred_check
    _
  $region3: #{tile.23} parent=0 // pred_check_branch
    %3 = sbr.rel (0) target = $region5
  $region4: #{tile.23} parent=0 // pred_region
    _
  $region5: #{tile.23} parent=0 // pred_fallthru
    _
  %v4 = vld [vmem:[%s0] ss:$0 sm:$0xff]
  %5 = vst [vmem:[%s1] sm:$0xff] %v4
  %s6 = scalar_lea.vmem %s1, 8
  %7 = vst [vmem:[%s6] sm:$0xff] %v4

// kernel: tile.24
$region0: #{tile.24}
  %s0 = inlined_call_operand.vmem [shape: f32[16,8], index: 0, kind: input, shape index: {}]
  %s1 = inlined_call_operand.vmem [shape: f32[1,128], index: 1, kind: output, shape index: {}]
  $region1: #{tile.24} parent=0
    #allocation0 [shape = 'u8[4096]{0}', space=vmem, size = 0x1000, scoped, tag = 'scoped mem for output reshape']
    %v2 = vld [vmem:[%s0] sm:$0x1]
    %vm3 = vcmask 64512
    %4 = vst.msk [vmem:[#allocation0] sm:$0x1] %vm3, %v2
    %s5 = scalar_lea.vmem %s0, 15
    %v6 = vld [vmem:[%s5] sm:$0x1]
    %7 = vrot.lane.b32.xlu0 %v6, 120
    %v8 = vpop.permute.xlu0 %7
    %vm9 = vcmask 1048512
    %10 = vst.msk [vmem:[#allocation0] sm:$0x1] %vm9, %v8
    %s11 = scalar_lea.vmem %s0, 14
    %v12 = vld [vmem:[%s11] sm:$0x1]
    %13 = vrot.lane.b32.xlu0 %v12, 112
    %v14 = vpop.permute.xlu0 %13
    %vm15 = vcmask 982912
    %16 = vst.msk [vmem:[#allocation0] sm:$0x1] %vm15, %v14
    %s17 = scalar_lea.vmem %s0, 13
    %v18 = vld [vmem:[%s17] sm:$0x1]
    %19 = vrot.lane.b32.xlu0 %v18, 104
    %v20 = vpop.permute.xlu0 %19
    %vm21 = vcmask 917312
    %22 = vst.msk [vmem:[#allocation0] sm:$0x1] %vm21, %v20
    %s23 = scalar_lea.vmem %s0, 12
    %v24 = vld [vmem:[%s23] sm:$0x1]
    %25 = vrot.lane.b32.xlu0 %v24, 96
    %v26 = vpop.permute.xlu0 %25
    %vm27 = vcmask 851712
    %28 = vst.msk [vmem:[#allocation0] sm:$0x1] %vm27, %v26
    %s29 = scalar_lea.vmem %s0, 11
    %v30 = vld [vmem:[%s29] sm:$0x1]
    %31 = vrot.lane.b32.xlu0 %v30, 88
    %v32 = vpop.permute.xlu0 %31
    %vm33 = vcmask 786112
    %34 = vst.msk [vmem:[#allocation0] sm:$0x1] %vm33, %v32
    %s35 = scalar_lea.vmem %s0, 10
    %v36 = vld [vmem:[%s35] sm:$0x1]
    %37 = vrot.lane.b32.xlu0 %v36, 80
    %v38 = vpop.permute.xlu0 %37
    %vm39 = vcmask 720512
    %40 = vst.msk [vmem:[#allocation0] sm:$0x1] %vm39, %v38
    %s41 = scalar_lea.vmem %s0, 9
    %v42 = vld [vmem:[%s41] sm:$0x1]
    %43 = vrot.lane.b32.xlu0 %v42, 72
    %v44 = vpop.permute.xlu0 %43
    %vm45 = vcmask 654912
    %46 = vst.msk [vmem:[#allocation0] sm:$0x1] %vm45, %v44
    %s47 = scalar_lea.vmem %s0, 8
    %v48 = vld [vmem:[%s47] sm:$0x1]
    %49 = vrot.lane.b32.xlu0 %v48, 64
    %v50 = vpop.permute.xlu0 %49
    %vm51 = vcmask 589312
    %52 = vst.msk [vmem:[#allocation0] sm:$0x1] %vm51, %v50
    %s53 = scalar_lea.vmem %s0, 7
    %v54 = vld [vmem:[%s53] sm:$0x1]
    %55 = vrot.lane.b32.xlu0 %v54, 56
    %v56 = vpop.permute.xlu0 %55
    %vm57 = vcmask 523712
    %58 = vst.msk [vmem:[#allocation0] sm:$0x1] %vm57, %v56
    %s59 = scalar_lea.vmem %s0, 6
    %v60 = vld [vmem:[%s59] sm:$0x1]
    %61 = vrot.lane.b32.xlu0 %v60, 48
    %v62 = vpop.permute.xlu0 %61
    %vm63 = vcmask 458112
    %64 = vst.msk [vmem:[#allocation0] sm:$0x1] %vm63, %v62
    %s65 = scalar_lea.vmem %s0, 5
    %v66 = vld [vmem:[%s65] sm:$0x1]
    %67 = vrot.lane.b32.xlu0 %v66, 40
    %v68 = vpop.permute.xlu0 %67
    %vm69 = vcmask 392512
    %70 = vst.msk [vmem:[#allocation0] sm:$0x1] %vm69, %v68
    %s71 = scalar_lea.vmem %s0, 4
    %v72 = vld [vmem:[%s71] sm:$0x1]
    %73 = vrot.lane.b32.xlu0 %v72, 32
    %v74 = vpop.permute.xlu0 %73
    %vm75 = vcmask 326912
    %76 = vst.msk [vmem:[#allocation0] sm:$0x1] %vm75, %v74
    %s77 = scalar_lea.vmem %s0, 3
    %v78 = vld [vmem:[%s77] sm:$0x1]
    %79 = vrot.lane.b32.xlu0 %v78, 24
    %v80 = vpop.permute.xlu0 %79
    %vm81 = vcmask 261312
    %82 = vst.msk [vmem:[#allocation0] sm:$0x1] %vm81, %v80
    %s83 = scalar_lea.vmem %s0, 2
    %v84 = vld [vmem:[%s83] sm:$0x1]
    %85 = vrot.lane.b32.xlu0 %v84, 16
    %v86 = vpop.permute.xlu0 %85
    %vm87 = vcmask 195712
    %88 = vst.msk [vmem:[#allocation0] sm:$0x1] %vm87, %v86
    %s89 = scalar_lea.vmem %s0, 1
    %v90 = vld [vmem:[%s89] sm:$0x1]
    %91 = vrot.lane.b32.xlu0 %v90, 8
    %v92 = vpop.permute.xlu0 %91
    %vm93 = vcmask 130112
    %94 = vst.msk [vmem:[#allocation0] sm:$0x1] %vm93, %v92
    %s96 = ssub.s32 2, 1
    %v97 = vld [vmem:[#allocation0] sm:%s96]
    %s99 = ssub.s32 2, 1
    %100 = vst [vmem:[%s1] sm:%s99] %v97

// kernel: tile.28
$region0: #{tile.28}
  #allocation0 [shape = 's32[1]{0}', space=sflag, size = 0x4, scoped, tag = 'scoped memory for tile.28']
  %s0 = inlined_call_operand.vmem [shape: f32[16], index: 0, kind: input, shape index: {}]
  %s1 = inlined_call_operand.vmem [shape: f32[8,16], index: 1, kind: output, shape index: {}]
  // Predicated region
  $region2: #{tile.28} parent=0 // pred_check
    _
  $region3: #{tile.28} parent=0 // pred_check_branch
    %3 = sbr.rel (0) target = $region5
  $region4: #{tile.28} parent=0 // pred_region
    _
  $region5: #{tile.28} parent=0 // pred_fallthru
    _
  %v4 = vld [vmem:[%s0] ss:$0 sm:$0xff]
  %5 = vst [vmem:[%s1] sm:$0xff] %v4

// kernel: tile.29
$region0: #{tile.29}
  %s0 = inlined_call_operand.vmem [shape: f32[8,16], index: 0, kind: input, shape index: {}]
  %s1 = inlined_call_operand.vmem [shape: f32[1,128], index: 1, kind: output, shape index: {}]
  $region1: #{tile.29} parent=0
    #allocation0 [shape = 'u8[4096]{0}', space=vmem, size = 0x1000, scoped, tag = 'scoped mem for output reshape']
    %v2 = vld [vmem:[%s0] sm:$0x1]
    %vm3 = vcmask 130048
    %4 = vst.msk [vmem:[#allocation0] sm:$0x1] %vm3, %v2
    %s5 = scalar_lea.vmem %s0, 7
    %v6 = vld [vmem:[%s5] sm:$0x1]
    %7 = vrot.lane.b32.xlu0 %v6, 112
    %v8 = vpop.permute.xlu0 %7
    %vm9 = vcmask 1048448
    %10 = vst.msk [vmem:[#allocation0] sm:$0x1] %vm9, %v8
    %s11 = scalar_lea.vmem %s0, 6
    %v12 = vld [vmem:[%s11] sm:$0x1]
    %13 = vrot.lane.b32.xlu0 %v12, 96
    %v14 = vpop.permute.xlu0 %13
    %vm15 = vcmask 917248
    %16 = vst.msk [vmem:[#allocation0] sm:$0x1] %vm15, %v14
    %s17 = scalar_lea.vmem %s0, 5
    %v18 = vld [vmem:[%s17] sm:$0x1]
    %19 = vrot.lane.b32.xlu0 %v18, 80
    %v20 = vpop.permute.xlu0 %19
    %vm21 = vcmask 786048
    %22 = vst.msk [vmem:[#allocation0] sm:$0x1] %vm21, %v20
    %s23 = scalar_lea.vmem %s0, 4
    %v24 = vld [vmem:[%s23] sm:$0x1]
    %25 = vrot.lane.b32.xlu0 %v24, 64
    %v26 = vpop.permute.xlu0 %25
    %vm27 = vcmask 654848
    %28 = vst.msk [vmem:[#allocation0] sm:$0x1] %vm27, %v26
    %s29 = scalar_lea.vmem %s0, 3
    %v30 = vld [vmem:[%s29] sm:$0x1]
    %31 = vrot.lane.b32.xlu0 %v30, 48
    %v32 = vpop.permute.xlu0 %31
    %vm33 = vcmask 523648
    %34 = vst.msk [vmem:[#allocation0] sm:$0x1] %vm33, %v32
    %s35 = scalar_lea.vmem %s0, 2
    %v36 = vld [vmem:[%s35] sm:$0x1]
    %37 = vrot.lane.b32.xlu0 %v36, 32
    %v38 = vpop.permute.xlu0 %37
    %vm39 = vcmask 392448
    %40 = vst.msk [vmem:[#allocation0] sm:$0x1] %vm39, %v38
    %s41 = scalar_lea.vmem %s0, 1
    %v42 = vld [vmem:[%s41] sm:$0x1]
    %43 = vrot.lane.b32.xlu0 %v42, 16
    %v44 = vpop.permute.xlu0 %43
    %vm45 = vcmask 261248
    %46 = vst.msk [vmem:[#allocation0] sm:$0x1] %vm45, %v44
    %s48 = ssub.s32 2, 1
    %v49 = vld [vmem:[#allocation0] sm:%s48]
    %s51 = ssub.s32 2, 1
    %52 = vst [vmem:[%s1] sm:%s51] %v49

// kernel: tile.33
$region0: #{tile.33}
  #allocation0 [shape = 's32[1]{0}', space=sflag, size = 0x4, scoped, tag = 'scoped memory for tile.33']
  %s0 = inlined_call_operand.vmem [shape: f32[32], index: 0, kind: input, shape index: {}]
  %s1 = inlined_call_operand.vmem [shape: f32[4,32], index: 1, kind: output, shape index: {}]
  // Predicated region
  $region2: #{tile.33} parent=0 // pred_check
    _
  $region3: #{tile.33} parent=0 // pred_check_branch
    %3 = sbr.rel (0) target = $region5
  $region4: #{tile.33} parent=0 // pred_region
    _
  $region5: #{tile.33} parent=0 // pred_fallthru
    _
  %v4 = vld [vmem:[%s0] ss:$0 sm:$0xff]
  %5 = vst [vmem:[%s1] sm:$0xf] %v4

// kernel: tile.34
$region0: #{tile.34}
  %s0 = inlined_call_operand.vmem [shape: f32[4,32], index: 0, kind: input, shape index: {}]
  %s1 = inlined_call_operand.vmem [shape: f32[1,128], index: 1, kind: output, shape index: {}]
  $region1: #{tile.34} parent=0
    #allocation0 [shape = 'u8[4096]{0}', space=vmem, size = 0x1000, scoped, tag = 'scoped mem for output reshape']
    #allocation1 [shape = 'u8[4096]{0}', space=vmem, size = 0x1000, scoped, tag = 'scoped mem for input reshape']
    %s3 = ssub.s32 16, 1
    %v4 = vld [vmem:[%s0] sm:%s3]
    %5 = vst [vmem:[#allocation1] sm:%s3] %v4
    %v6 = vld [vmem:[#allocation1] sm:$0x1]
    %vm7 = vcmask 261120
    %8 = vst.msk [vmem:[#allocation0] sm:$0x1] %vm7, %v6
    %s9 = scalar_lea.vmem [#allocation1], 3
    %v10 = vld [vmem:[%s9] sm:$0x1]
    %11 = vrot.lane.b32.xlu0 %v10, 96
    %v12 = vpop.permute.xlu0 %11
    %vm13 = vcmask 1048320
    %14 = vst.msk [vmem:[#allocation0] sm:$0x1] %vm13, %v12
    %s15 = scalar_lea.vmem [#allocation1], 2
    %v16 = vld [vmem:[%s15] sm:$0x1]
    %17 = vrot.lane.b32.xlu0 %v16, 64
    %v18 = vpop.permute.xlu0 %17
    %vm19 = vcmask 785920
    %20 = vst.msk [vmem:[#allocation0] sm:$0x1] %vm19, %v18
    %s21 = scalar_lea.vmem [#allocation1], 1
    %v22 = vld [vmem:[%s21] sm:$0x1]
    %23 = vrot.lane.b32.xlu0 %v22, 32
    %v24 = vpop.permute.xlu0 %23
    %vm25 = vcmask 523520
    %26 = vst.msk [vmem:[#allocation0] sm:$0x1] %vm25, %v24
    %s28 = ssub.s32 2, 1
    %v29 = vld [vmem:[#allocation0] sm:%s28]
    %s31 = ssub.s32 2, 1
    %32 = vst [vmem:[%s1] sm:%s31] %v29

// kernel: tile.38
$region0: #{tile.38}
  #allocation0 [shape = 's32[1]{0}', space=sflag, size = 0x4, scoped, tag = 'scoped memory for tile.38']
  %s0 = inlined_call_operand.vmem [shape: f32[64], index: 0, kind: input, shape index: {}]
  %s1 = inlined_call_operand.vmem [shape: f32[2,64], index: 1, kind: output, shape index: {}]
  // Predicated region
  $region2: #{tile.38} parent=0 // pred_check
    _
  $region3: #{tile.38} parent=0 // pred_check_branch
    %3 = sbr.rel (0) target = $region5
  $region4: #{tile.38} parent=0 // pred_region
    _
  $region5: #{tile.38} parent=0 // pred_fallthru
    _
  %v4 = vld [vmem:[%s0] ss:$0 sm:$0xff]
  %5 = vst [vmem:[%s1] sm:$0x3] %v4

// kernel: tile.39
$region0: #{tile.39}
  %s0 = inlined_call_operand.vmem [shape: f32[2,64], index: 0, kind: input, shape index: {}]
  %s1 = inlined_call_operand.vmem [shape: f32[1,128], index: 1, kind: output, shape index: {}]
  $region1: #{tile.39} parent=0
    #allocation0 [shape = 'u8[4096]{0}', space=vmem, size = 0x1000, scoped, tag = 'scoped mem for output reshape']
    #allocation1 [shape = 'u8[4096]{0}', space=vmem, size = 0x1000, scoped, tag = 'scoped mem for input reshape']
    %s3 = ssub.s32 4, 1
    %v4 = vld [vmem:[%s0] sm:%s3]
    %5 = vst [vmem:[#allocation1] sm:%s3] %v4
    %v6 = vld [vmem:[#allocation1] sm:$0x1]
    %vm7 = vcmask 523264
    %8 = vst.msk [vmem:[#allocation0] sm:$0x1] %vm7, %v6
    %s9 = scalar_lea.vmem [#allocation1], 1
    %v10 = vld [vmem:[%s9] sm:$0x1]
    %11 = vrot.lane.b32.xlu0 %v10, 64
    %v12 = vpop.permute.xlu0 %11
    %vm13 = vcmask 1048064
    %14 = vst.msk [vmem:[#allocation0] sm:$0x1] %vm13, %v12
    %s16 = ssub.s32 2, 1
    %v17 = vld [vmem:[#allocation0] sm:%s16]
    %s19 = ssub.s32 2, 1
    %20 = vst [vmem:[%s1] sm:%s19] %v17

// kernel: feature_extract.1
$region0: #{feature_extract.1}
  #allocation0 [shape = 'u32[]', space=smem, size = 0x4, offset = 0x4, fixed_abs, tag = 'smem constant byte address 0x4 - core index']
  #allocation1 [shape = 'u32[72,128]{1,0:T(1,128)}', space=vmem, size = 0x9000, scoped, tag = 'internal scratch']
  %s0 = inlined_call_operand.vmem [shape: bf16[16,16,48], index: 0, kind: input, shape index: {}]
  %s1 = inlined_call_operand.vmem [shape: bf16[144,128], index: 1, kind: input, shape index: {}]
  %s2 = inlined_call_operand.vmem [shape: f32[1,128], index: 2, kind: input, shape index: {}]
  %s3 = inlined_call_operand.vmem [shape: bf16[384,128], index: 3, kind: input, shape index: {}]
  %s4 = inlined_call_operand.vmem [shape: f32[1,128], index: 4, kind: input, shape index: {}]
  %s5 = inlined_call_operand.vmem [shape: bf16[384,128], index: 5, kind: input, shape index: {}]
  %s6 = inlined_call_operand.vmem [shape: f32[1,128], index: 6, kind: input, shape index: {}]
  %s7 = inlined_call_operand.vmem [shape: bf16[384,128], index: 7, kind: input, shape index: {}]
  %s8 = inlined_call_operand.vmem [shape: f32[1,128], index: 8, kind: input, shape index: {}]
  %s9 = inlined_call_operand.vmem [shape: f32[2,16,128], index: 9, kind: output, shape index: {}]
  %s10 = sld [smem:[#allocation0]]
  $region46: #{feature_extract.1} parent=0
    _
  %s12 = ssub.s32 1, %s10
  %s13 = scalar_select 0, %s12, %s10
  // Predicated region
  $region2: #{feature_extract.1} parent=0 // pred_check
    _
  $region3: #{feature_extract.1} parent=0 // pred_check_branch
    %15 = sbr.rel (0) target = $region5
  $region4: #{feature_extract.1} parent=0 // pred_region
    _
  $region5: #{feature_extract.1} parent=0 // pred_fallthru
    _
  // Predicated region
  $region6: #{feature_extract.1} parent=0 // pred_check
    _
  $region7: #{feature_extract.1} parent=0 // pred_check_branch
    %17 = sbr.rel (0) target = $region9
  $region8: #{feature_extract.1} parent=0 // pred_region
    _
  $region9: #{feature_extract.1} parent=0 // pred_fallthru
    _
  // Predicated region
  $region10: #{feature_extract.1} parent=0 // pred_check
    _
  $region11: #{feature_extract.1} parent=0 // pred_check_branch
    %19 = sbr.rel (0) target = $region13
  $region12: #{feature_extract.1} parent=0 // pred_region
    _
  $region13: #{feature_extract.1} parent=0 // pred_fallthru
    _
  // Predicated region
  $region14: #{feature_extract.1} parent=0 // pred_check
    _
  $region15: #{feature_extract.1} parent=0 // pred_check_branch
    %21 = sbr.rel (0) target = $region17
  $region16: #{feature_extract.1} parent=0 // pred_region
    _
  $region17: #{feature_extract.1} parent=0 // pred_fallthru
    _
  // Predicated region
  $region18: #{feature_extract.1} parent=0 // pred_check
    _
  $region19: #{feature_extract.1} parent=0 // pred_check_branch
    %23 = sbr.rel (0) target = $region21
  $region20: #{feature_extract.1} parent=0 // pred_region
    _
  $region21: #{feature_extract.1} parent=0 // pred_fallthru
    _
  // Predicated region
  $region22: #{feature_extract.1} parent=0 // pred_check
    _
  $region23: #{feature_extract.1} parent=0 // pred_check_branch
    %25 = sbr.rel (0) target = $region25
  $region24: #{feature_extract.1} parent=0 // pred_region
    _
  $region25: #{feature_extract.1} parent=0 // pred_fallthru
    _
  // Predicated region
  $region26: #{feature_extract.1} parent=0 // pred_check
    _
  $region27: #{feature_extract.1} parent=0 // pred_check_branch
    %27 = sbr.rel (0) target = $region29
  $region28: #{feature_extract.1} parent=0 // pred_region
    _
  $region29: #{feature_extract.1} parent=0 // pred_fallthru
    _
  // Predicated region
  $region30: #{feature_extract.1} parent=0 // pred_check
    _
  $region31: #{feature_extract.1} parent=0 // pred_check_branch
    %29 = sbr.rel (0) target = $region33
  $region32: #{feature_extract.1} parent=0 // pred_region
    _
  $region33: #{feature_extract.1} parent=0 // pred_fallthru
    _
  // Predicated region
  $region34: #{feature_extract.1} parent=0 // pred_check
    _
  $region35: #{feature_extract.1} parent=0 // pred_check_branch
    %31 = sbr.rel (0) target = $region37
  $region36: #{feature_extract.1} parent=0 // pred_region
    _
  $region37: #{feature_extract.1} parent=0 // pred_fallthru
    _
  %v33 = vld [vmem:[%s0] sm:$0xf]
  %v34 = vld [vmem:[%s0 + $0x4] sm:$0xf]
  %v35 = vld [vmem:[%s0 + $0x8] sm:$0xf]
  %v36 = vld [vmem:[%s0 + $0xc] sm:$0xf]
  %v37 = vld [vmem:[%s0 + $0x10] sm:$0xf]
  %v38 = vld [vmem:[%s0 + $0x14] sm:$0xf]
  %v39 = vld [vmem:[%s0 + $0x18] sm:$0xf]
  %v40 = vld [vmem:[%s0 + $0x1c] sm:$0xf]
  %v41 = vld [vmem:[%s0 + $0x20] sm:$0xf]
  %v42 = vld [vmem:[%s0 + $0x24] sm:$0xf]
  %v43 = vld [vmem:[%s0 + $0x28] sm:$0xf]
  %v44 = vld [vmem:[%s0 + $0x2c] sm:$0xf]
  %v45 = vld [vmem:[%s0 + $0x30] sm:$0xf]
  %v46 = vld [vmem:[%s0 + $0x34] sm:$0xf]
  %v47 = vld [vmem:[%s0 + $0x38] sm:$0xf]
  %v48 = vld [vmem:[%s0 + $0x3c] sm:$0xf]
  %v49 = vld [vmem:[%s0 + $0x40] sm:$0xf]
  %v50 = vld [vmem:[%s0 + $0x44] sm:$0xf]
  %v51 = vld [vmem:[%s0 + $0x48] sm:$0xf]
  %v52 = vld [vmem:[%s0 + $0x4c] sm:$0xf]
  %v53 = vld [vmem:[%s0 + $0x50] sm:$0xf]
  %v54 = vld [vmem:[%s0 + $0x54] sm:$0xf]
  %v55 = vld [vmem:[%s0 + $0x58] sm:$0xf]
  %v56 = vld [vmem:[%s0 + $0x5c] sm:$0xf]
  %v57 = vld [vmem:[%s0 + $0x60] sm:$0xf]
  %v58 = vld [vmem:[%s0 + $0x64] sm:$0xf]
  %v59 = vld [vmem:[%s0 + $0x68] sm:$0xf]
  %v60 = vld [vmem:[%s0 + $0x6c] sm:$0xf]
  %v61 = vld [vmem:[%s0 + $0x70] sm:$0xf]
  %v62 = vld [vmem:[%s0 + $0x74] sm:$0xf]
  %v63 = vld [vmem:[%s0 + $0x78] sm:$0xf]
  %v64 = vld [vmem:[%s0 + $0x7c] sm:$0xf]
  %v97 = vunpack.c.l.b16 %v33
  %v98 = vunpack.c.l.b16 %v34
  %v99 = vunpack.c.l.b16 %v35
  %v100 = vunpack.c.l.b16 %v36
  %v101 = vunpack.c.l.b16 %v37
  %v102 = vunpack.c.l.b16 %v38
  %v103 = vunpack.c.l.b16 %v39
  %v104 = vunpack.c.l.b16 %v40
  %v105 = vunpack.c.l.b16 %v41
  %v106 = vunpack.c.l.b16 %v42
  %v107 = vunpack.c.l.b16 %v43
  %v108 = vunpack.c.l.b16 %v44
  %v109 = vunpack.c.l.b16 %v45
  %v110 = vunpack.c.l.b16 %v46
  %v111 = vunpack.c.l.b16 %v47
  %v112 = vunpack.c.l.b16 %v48
  %v113 = vunpack.c.l.b16 %v49
  %v114 = vunpack.c.l.b16 %v50
  %v115 = vunpack.c.l.b16 %v51
  %v116 = vunpack.c.l.b16 %v52
  %v117 = vunpack.c.l.b16 %v53
  %v118 = vunpack.c.l.b16 %v54
  %v119 = vunpack.c.l.b16 %v55
  %v120 = vunpack.c.l.b16 %v56
  %v121 = vunpack.c.l.b16 %v57
  %v122 = vunpack.c.l.b16 %v58
  %v123 = vunpack.c.l.b16 %v59
  %v124 = vunpack.c.l.b16 %v60
  %v125 = vunpack.c.l.b16 %v61
  %v126 = vunpack.c.l.b16 %v62
  %v127 = vunpack.c.l.b16 %v63
  %v128 = vunpack.c.l.b16 %v64
  %v129 = vpack.c.b16 %v98, %v97
  %v130 = vpack.c.b16 %v100, %v99
  %v131 = vpack.c.b16 %v102, %v101
  %v132 = vpack.c.b16 %v104, %v103
  %v133 = vpack.c.b16 %v106, %v105
  %v134 = vpack.c.b16 %v108, %v107
  %v135 = vpack.c.b16 %v110, %v109
  %v136 = vpack.c.b16 %v112, %v111
  %v137 = vpack.c.b16 %v114, %v113
  %v138 = vpack.c.b16 %v116, %v115
  %v139 = vpack.c.b16 %v118, %v117
  %v140 = vpack.c.b16 %v120, %v119
  %v141 = vpack.c.b16 %v122, %v121
  %v142 = vpack.c.b16 %v124, %v123
  %v143 = vpack.c.b16 %v126, %v125
  %v144 = vpack.c.b16 %v128, %v127
  %145 = vrot.lane.b32.xlu0 %v129, 48
  %v146 = vpop.permute.xlu0 %145
  %147 = vrot.lane.b32.xlu0 %v130, 48
  %v148 = vpop.permute.xlu0 %147
  %149 = vrot.lane.b32.xlu0 %v131, 48
  %v150 = vpop.permute.xlu0 %149
  %151 = vrot.lane.b32.xlu0 %v132, 48
  %v152 = vpop.permute.xlu0 %151
  %153 = vrot.lane.b32.xlu0 %v133, 48
  %v154 = vpop.permute.xlu0 %153
  %155 = vrot.lane.b32.xlu0 %v134, 48
  %v156 = vpop.permute.xlu0 %155
  %157 = vrot.lane.b32.xlu0 %v135, 48
  %v158 = vpop.permute.xlu0 %157
  %159 = vrot.lane.b32.xlu0 %v136, 48
  %v160 = vpop.permute.xlu0 %159
  %161 = vrot.lane.b32.xlu0 %v137, 48
  %v162 = vpop.permute.xlu0 %161
  %163 = vrot.lane.b32.xlu0 %v138, 48
  %v164 = vpop.permute.xlu0 %163
  %165 = vrot.lane.b32.xlu0 %v139, 48
  %v166 = vpop.permute.xlu0 %165
  %167 = vrot.lane.b32.xlu0 %v140, 48
  %v168 = vpop.permute.xlu0 %167
  %169 = vrot.lane.b32.xlu0 %v141, 48
  %v170 = vpop.permute.xlu0 %169
  %171 = vrot.lane.b32.xlu0 %v142, 48
  %v172 = vpop.permute.xlu0 %171
  %173 = vrot.lane.b32.xlu0 %v143, 48
  %v174 = vpop.permute.xlu0 %173
  %175 = vrot.lane.b32.xlu0 %v144, 48
  %v176 = vpop.permute.xlu0 %175
  %178 = vrot.lane.b32.xlu0 %v130, 96
  %v179 = vpop.permute.xlu0 %178
  %180 = vrot.lane.b32.xlu0 %v131, 96
  %v181 = vpop.permute.xlu0 %180
  %182 = vrot.lane.b32.xlu0 %v132, 96
  %v183 = vpop.permute.xlu0 %182
  %184 = vrot.lane.b32.xlu0 %v133, 96
  %v185 = vpop.permute.xlu0 %184
  %186 = vrot.lane.b32.xlu0 %v134, 96
  %v187 = vpop.permute.xlu0 %186
  %188 = vrot.lane.b32.xlu0 %v135, 96
  %v189 = vpop.permute.xlu0 %188
  %190 = vrot.lane.b32.xlu0 %v136, 96
  %v191 = vpop.permute.xlu0 %190
  %192 = vrot.lane.b32.xlu0 %v137, 96
  %v193 = vpop.permute.xlu0 %192
  %194 = vrot.lane.b32.xlu0 %v138, 96
  %v195 = vpop.permute.xlu0 %194
  %196 = vrot.lane.b32.xlu0 %v139, 96
  %v197 = vpop.permute.xlu0 %196
  %198 = vrot.lane.b32.xlu0 %v140, 96
  %v199 = vpop.permute.xlu0 %198
  %200 = vrot.lane.b32.xlu0 %v141, 96
  %v201 = vpop.permute.xlu0 %200
  %202 = vrot.lane.b32.xlu0 %v142, 96
  %v203 = vpop.permute.xlu0 %202
  %204 = vrot.lane.b32.xlu0 %v143, 96
  %v205 = vpop.permute.xlu0 %204
  %206 = vrot.lane.b32.xlu0 %v144, 96
  %v207 = vpop.permute.xlu0 %206
  %208 = vrot.lane.b32.xlu0 0, 96
  %v209 = vpop.permute.xlu0 %208
  %vm210 = vcmask 392192
  %v213 = vsel %vm210, 0, %v146
  %v216 = vsel %vm210, %v129, %v148
  %v219 = vsel %vm210, %v130, %v150
  %v222 = vsel %vm210, %v131, %v152
  %v225 = vsel %vm210, %v132, %v154
  %v228 = vsel %vm210, %v133, %v156
  %v231 = vsel %vm210, %v134, %v158
  %v234 = vsel %vm210, %v135, %v160
  %v237 = vsel %vm210, %v136, %v162
  %v240 = vsel %vm210, %v137, %v164
  %v243 = vsel %vm210, %v138, %v166
  %v246 = vsel %vm210, %v139, %v168
  %v249 = vsel %vm210, %v140, %v170
  %v252 = vsel %vm210, %v141, %v172
  %v255 = vsel %vm210, %v142, %v174
  %v258 = vsel %vm210, %v143, %v176
  %vm259 = vcmask 785408
  %v261 = vsel %vm259, %v213, %v179
  %v264 = vsel %vm259, %v216, %v181
  %v267 = vsel %vm259, %v219, %v183
  %v270 = vsel %vm259, %v222, %v185
  %v273 = vsel %vm259, %v225, %v187
  %v276 = vsel %vm259, %v228, %v189
  %v279 = vsel %vm259, %v231, %v191
  %v282 = vsel %vm259, %v234, %v193
  %v285 = vsel %vm259, %v237, %v195
  %v288 = vsel %vm259, %v240, %v197
  %v291 = vsel %vm259, %v243, %v199
  %v294 = vsel %vm259, %v246, %v201
  %v297 = vsel %vm259, %v249, %v203
  %v300 = vsel %vm259, %v252, %v205
  %v303 = vsel %vm259, %v255, %v207
  %v306 = vsel %vm259, %v258, %v209
  %v308 = vld [vmem:[%s1] sm:$0xf]
  %v309 = vld [vmem:[%s1 + $0x4] sm:$0xf]
  %v310 = vld [vmem:[%s1 + $0x8] sm:$0xf]
  %v311 = vld [vmem:[%s1 + $0xc] sm:$0xf]
  %v312 = vld [vmem:[%s1 + $0x10] sm:$0xf]
  %v313 = vld [vmem:[%s1 + $0x14] sm:$0xf]
  %v314 = vld [vmem:[%s1 + $0x18] sm:$0xf]
  %v315 = vld [vmem:[%s1 + $0x1c] sm:$0xf]
  %v316 = vld [vmem:[%s1 + $0x20] sm:$0xf]
  %v317 = vld [vmem:[%s1 + $0x24] sm:$0xf]
  %v318 = vld [vmem:[%s1 + $0x28] sm:$0xf]
  %v319 = vld [vmem:[%s1 + $0x2c] sm:$0xf]
  %v320 = vld [vmem:[%s1 + $0x30] sm:$0xf]
  %v321 = vld [vmem:[%s1 + $0x34] sm:$0xf]
  %v322 = vld [vmem:[%s1 + $0x38] sm:$0xf]
  %v323 = vld [vmem:[%s1 + $0x3c] sm:$0xf]
  %v324 = vld [vmem:[%s1 + $0x40] sm:$0xf]
  %v325 = vld [vmem:[%s1 + $0x44] sm:$0xf]
  %v326 = vld [vmem:[%s2] sm:$0x1]
  %v328 = vperm.slane %v326, 0
  %v348 = vunpack.c.l.b16 %v308
  %v349 = vunpack.c.l.b16 %v309
  %v350 = vunpack.c.l.b16 %v310
  %v351 = vunpack.c.l.b16 %v311
  %v352 = vunpack.c.l.b16 %v312
  %v353 = vunpack.c.l.b16 %v313
  %v354 = vunpack.c.l.b16 %v314
  %v355 = vunpack.c.l.b16 %v315
  %v356 = vunpack.c.l.b16 %v316
  %v357 = vunpack.c.l.b16 %v317
  %v358 = vunpack.c.l.b16 %v318
  %v359 = vunpack.c.l.b16 %v319
  %v360 = vunpack.c.l.b16 %v320
  %v361 = vunpack.c.l.b16 %v321
  %v362 = vunpack.c.l.b16 %v322
  %v363 = vunpack.c.l.b16 %v323
  %v364 = vunpack.c.l.b16 %v324
  %v365 = vunpack.c.l.b16 %v325
  %v366 = vpack.c.b16 %v349, %v348
  %v367 = vpack.c.b16 %v351, %v350
  %v368 = vpack.c.b16 %v353, %v352
  %v369 = vpack.c.b16 %v355, %v354
  %v370 = vpack.c.b16 %v357, %v356
  %v371 = vpack.c.b16 %v359, %v358
  %v372 = vpack.c.b16 %v361, %v360
  %v373 = vpack.c.b16 %v363, %v362
  %v374 = vpack.c.b16 %v365, %v364
  %vm384 = vcmask 130048
  %v385 = vsel %vm384, %v179, 0
  %v387 = vsel %vm384, %v181, 0
  %v389 = vsel %vm384, %v183, 0
  %v391 = vsel %vm384, %v185, 0
  %v393 = vsel %vm384, %v187, 0
  %v395 = vsel %vm384, %v189, 0
  %v397 = vsel %vm384, %v191, 0
  %v399 = vsel %vm384, %v193, 0
  %v401 = vsel %vm384, %v195, 0
  %v403 = vsel %vm384, %v197, 0
  %v405 = vsel %vm384, %v199, 0
  %v407 = vsel %vm384, %v201, 0
  %v409 = vsel %vm384, %v203, 0
  %v411 = vsel %vm384, %v205, 0
  %v413 = vsel %vm384, %v207, 0
  %v415 = vsel %vm384, %v209, 0
  %417 = vmatpush.bf16.msra.mxu0 %v373
  %418 = vmatpush.bf16.msra.mxu0 %v372
  %419 = vmatpush.bf16.msra.mxu0 %v371
  %420 = vmatpush.bf16.msra.mxu0 %v370
  %421 = vmatpush.bf16.msra.mxu0 %v369
  %422 = vmatpush.bf16.msra.mxu0 %v368
  %423 = vmatpush.bf16.msra.mxu0 %v367
  %424 = vmatpush.bf16.msra.mxu0 %v366
  %425 = vmatmul.bf16.gmra.mxu0 %v261
  %v426 = vpop.f32.mrf.mxu0
  %v427 = vadd.f32 %v328, %v426
  %v428 = vpop.f32.mrf.mxu0
  %v429 = vadd.f32 %v328, %v428
  %430 = vmatmul.bf16.gmra.mxu0 %v264
  %v431 = vpop.f32.mrf.mxu0
  %v432 = vadd.f32 %v328, %v431
  %v433 = vpop.f32.mrf.mxu0
  %v434 = vadd.f32 %v328, %v433
  %435 = vmatmul.bf16.gmra.mxu0 %v267
  %v436 = vpop.f32.mrf.mxu0
  %v437 = vadd.f32 %v328, %v436
  %v438 = vpop.f32.mrf.mxu0
  %v439 = vadd.f32 %v328, %v438
  %440 = vmatmul.bf16.gmra.mxu0 %v270
  %v441 = vpop.f32.mrf.mxu0
  %v442 = vadd.f32 %v328, %v441
  %v443 = vpop.f32.mrf.mxu0
  %v444 = vadd.f32 %v328, %v443
  %445 = vmatmul.bf16.gmra.mxu0 %v273
  %v446 = vpop.f32.mrf.mxu0
  %v447 = vadd.f32 %v328, %v446
  %v448 = vpop.f32.mrf.mxu0
  %v449 = vadd.f32 %v328, %v448
  %450 = vmatmul.bf16.gmra.mxu0 %v276
  %v451 = vpop.f32.mrf.mxu0
  %v452 = vadd.f32 %v328, %v451
  %v453 = vpop.f32.mrf.mxu0
  %v454 = vadd.f32 %v328, %v453
  %455 = vmatmul.bf16.gmra.mxu0 %v279
  %v456 = vpop.f32.mrf.mxu0
  %v457 = vadd.f32 %v328, %v456
  %v458 = vpop.f32.mrf.mxu0
  %v459 = vadd.f32 %v328, %v458
  %460 = vmatmul.bf16.gmra.mxu0 %v282
  %v461 = vpop.f32.mrf.mxu0
  %v462 = vadd.f32 %v328, %v461
  %v463 = vpop.f32.mrf.mxu0
  %v464 = vadd.f32 %v328, %v463
  %465 = vmatmul.bf16.gmra.mxu0 %v285
  %v466 = vpop.f32.mrf.mxu0
  %v467 = vadd.f32 %v328, %v466
  %v468 = vpop.f32.mrf.mxu0
  %v469 = vadd.f32 %v328, %v468
  %470 = vmatmul.bf16.gmra.mxu0 %v288
  %v471 = vpop.f32.mrf.mxu0
  %v472 = vadd.f32 %v328, %v471
  %v473 = vpop.f32.mrf.mxu0
  %v474 = vadd.f32 %v328, %v473
  %475 = vmatmul.bf16.gmra.mxu0 %v291
  %v476 = vpop.f32.mrf.mxu0
  %v477 = vadd.f32 %v328, %v476
  %v478 = vpop.f32.mrf.mxu0
  %v479 = vadd.f32 %v328, %v478
  %480 = vmatmul.bf16.gmra.mxu0 %v294
  %v481 = vpop.f32.mrf.mxu0
  %v482 = vadd.f32 %v328, %v481
  %v483 = vpop.f32.mrf.mxu0
  %v484 = vadd.f32 %v328, %v483
  %485 = vmatmul.bf16.gmra.mxu0 %v297
  %v486 = vpop.f32.mrf.mxu0
  %v487 = vadd.f32 %v328, %v486
  %v488 = vpop.f32.mrf.mxu0
  %v489 = vadd.f32 %v328, %v488
  %490 = vmatmul.bf16.gmra.mxu0 %v300
  %v491 = vpop.f32.mrf.mxu0
  %v492 = vadd.f32 %v328, %v491
  %v493 = vpop.f32.mrf.mxu0
  %v494 = vadd.f32 %v328, %v493
  %495 = vmatmul.bf16.gmra.mxu0 %v303
  %v496 = vpop.f32.mrf.mxu0
  %v497 = vadd.f32 %v328, %v496
  %v498 = vpop.f32.mrf.mxu0
  %v499 = vadd.f32 %v328, %v498
  %500 = vmatmul.bf16.gmra.mxu0 %v306
  %v501 = vpop.f32.mrf.mxu0
  %v502 = vadd.f32 %v328, %v501
  %v503 = vpop.f32.mrf.mxu0
  %v504 = vadd.f32 %v328, %v503
  %505 = vdwg.mxu0
  %506 = vmatpush.bf16.msra.mxu0 0
  %507 = vmatpush.bf16.msra.mxu0 0
  %508 = vmatpush.bf16.msra.mxu0 0
  %509 = vmatpush.bf16.msra.mxu0 0
  %510 = vmatpush.bf16.msra.mxu0 0
  %511 = vmatpush.bf16.msra.mxu0 0
  %512 = vmatpush.bf16.msra.mxu0 0
  %513 = vmatpush.bf16.msra.mxu0 %v374
  %514 = vmatmul.bf16.gmra.mxu0 %v385
  %v515 = vpop.f32.mrf.mxu0
  %v516 = vadd.f32 %v427, %v515
  %v517 = vpop.f32.mrf.mxu0
  %v518 = vadd.f32 %v429, %v517
  %519 = vmatmul.bf16.gmra.mxu0 %v387
  %v520 = vpop.f32.mrf.mxu0
  %v521 = vadd.f32 %v432, %v520
  %v522 = vpop.f32.mrf.mxu0
  %v523 = vadd.f32 %v434, %v522
  %524 = vmatmul.bf16.gmra.mxu0 %v389
  %v525 = vpop.f32.mrf.mxu0
  %v526 = vadd.f32 %v437, %v525
  %v527 = vpop.f32.mrf.mxu0
  %v528 = vadd.f32 %v439, %v527
  %529 = vmatmul.bf16.gmra.mxu0 %v391
  %v530 = vpop.f32.mrf.mxu0
  %v531 = vadd.f32 %v442, %v530
  %v532 = vpop.f32.mrf.mxu0
  %v533 = vadd.f32 %v444, %v532
  %534 = vmatmul.bf16.gmra.mxu0 %v393
  %v535 = vpop.f32.mrf.mxu0
  %v536 = vadd.f32 %v447, %v535
  %v537 = vpop.f32.mrf.mxu0
  %v538 = vadd.f32 %v449, %v537
  %539 = vmatmul.bf16.gmra.mxu0 %v395
  %v540 = vpop.f32.mrf.mxu0
  %v541 = vadd.f32 %v452, %v540
  %v542 = vpop.f32.mrf.mxu0
  %v543 = vadd.f32 %v454, %v542
  %544 = vmatmul.bf16.gmra.mxu0 %v397
  %v545 = vpop.f32.mrf.mxu0
  %v546 = vadd.f32 %v457, %v545
  %v547 = vpop.f32.mrf.mxu0
  %v548 = vadd.f32 %v459, %v547
  %549 = vmatmul.bf16.gmra.mxu0 %v399
  %v550 = vpop.f32.mrf.mxu0
  %v551 = vadd.f32 %v462, %v550
  %v552 = vpop.f32.mrf.mxu0
  %v553 = vadd.f32 %v464, %v552
  %554 = vmatmul.bf16.gmra.mxu0 %v401
  %v555 = vpop.f32.mrf.mxu0
  %v556 = vadd.f32 %v467, %v555
  %v557 = vpop.f32.mrf.mxu0
  %v558 = vadd.f32 %v469, %v557
  %559 = vmatmul.bf16.gmra.mxu0 %v403
  %v560 = vpop.f32.mrf.mxu0
  %v561 = vadd.f32 %v472, %v560
  %v562 = vpop.f32.mrf.mxu0
  %v563 = vadd.f32 %v474, %v562
  %564 = vmatmul.bf16.gmra.mxu0 %v405
  %v565 = vpop.f32.mrf.mxu0
  %v566 = vadd.f32 %v477, %v565
  %v567 = vpop.f32.mrf.mxu0
  %v568 = vadd.f32 %v479, %v567
  %569 = vmatmul.bf16.gmra.mxu0 %v407
  %v570 = vpop.f32.mrf.mxu0
  %v571 = vadd.f32 %v482, %v570
  %v572 = vpop.f32.mrf.mxu0
  %v573 = vadd.f32 %v484, %v572
  %574 = vmatmul.bf16.gmra.mxu0 %v409
  %v575 = vpop.f32.mrf.mxu0
  %v576 = vadd.f32 %v487, %v575
  %v577 = vpop.f32.mrf.mxu0
  %v578 = vadd.f32 %v489, %v577
  %579 = vmatmul.bf16.gmra.mxu0 %v411
  %v580 = vpop.f32.mrf.mxu0
  %v581 = vadd.f32 %v492, %v580
  %v582 = vpop.f32.mrf.mxu0
  %v583 = vadd.f32 %v494, %v582
  %584 = vmatmul.bf16.gmra.mxu0 %v413
  %v585 = vpop.f32.mrf.mxu0
  %v586 = vadd.f32 %v497, %v585
  %v587 = vpop.f32.mrf.mxu0
  %v588 = vadd.f32 %v499, %v587
  %589 = vmatmul.bf16.gmra.mxu0 %v415
  %v590 = vpop.f32.mrf.mxu0
  %v591 = vadd.f32 %v502, %v590
  %v592 = vpop.f32.mrf.mxu0
  %v593 = vadd.f32 %v504, %v592
  %594 = vdwg.mxu0
  %v595 = vmax.f32 %v516, 0.0
  %v596 = vmax.f32 %v518, 0.0
  %v597 = vmax.f32 %v521, 0.0
  %v598 = vmax.f32 %v523, 0.0
  %v599 = vmax.f32 %v526, 0.0
  %v600 = vmax.f32 %v528, 0.0
  %v601 = vmax.f32 %v531, 0.0
  %v602 = vmax.f32 %v533, 0.0
  %v603 = vmax.f32 %v536, 0.0
  %v604 = vmax.f32 %v538, 0.0
  %v605 = vmax.f32 %v541, 0.0
  %v606 = vmax.f32 %v543, 0.0
  %v607 = vmax.f32 %v546, 0.0
  %v608 = vmax.f32 %v548, 0.0
  %v609 = vmax.f32 %v551, 0.0
  %v610 = vmax.f32 %v553, 0.0
  %v611 = vmax.f32 %v556, 0.0
  %v612 = vmax.f32 %v558, 0.0
  %v613 = vmax.f32 %v561, 0.0
  %v614 = vmax.f32 %v563, 0.0
  %v615 = vmax.f32 %v566, 0.0
  %v616 = vmax.f32 %v568, 0.0
  %v617 = vmax.f32 %v571, 0.0
  %v618 = vmax.f32 %v573, 0.0
  %v619 = vmax.f32 %v576, 0.0
  %v620 = vmax.f32 %v578, 0.0
  %v621 = vmax.f32 %v581, 0.0
  %v622 = vmax.f32 %v583, 0.0
  %v623 = vmax.f32 %v586, 0.0
  %v624 = vmax.f32 %v588, 0.0
  %v625 = vmax.f32 %v591, 0.0
  %v626 = vmax.f32 %v593, 0.0
  %v627 = vpack.c.bf16 %v595, %v595
  %v628 = vpack.c.bf16 %v596, %v596
  %v629 = vpack.c.bf16 %v597, %v597
  %v630 = vpack.c.bf16 %v598, %v598
  %v631 = vpack.c.bf16 %v599, %v599
  %v632 = vpack.c.bf16 %v600, %v600
  %v633 = vpack.c.bf16 %v601, %v601
  %v634 = vpack.c.bf16 %v602, %v602
  %v635 = vpack.c.bf16 %v603, %v603
  %v636 = vpack.c.bf16 %v604, %v604
  %v637 = vpack.c.bf16 %v605, %v605
  %v638 = vpack.c.bf16 %v606, %v606
  %v639 = vpack.c.bf16 %v607, %v607
  %v640 = vpack.c.bf16 %v608, %v608
  %v641 = vpack.c.bf16 %v609, %v609
  %v642 = vpack.c.bf16 %v610, %v610
  %v643 = vpack.c.bf16 %v611, %v611
  %v644 = vpack.c.bf16 %v612, %v612
  %v645 = vpack.c.bf16 %v613, %v613
  %v646 = vpack.c.bf16 %v614, %v614
  %v647 = vpack.c.bf16 %v615, %v615
  %v648 = vpack.c.bf16 %v616, %v616
  %v649 = vpack.c.bf16 %v617, %v617
  %v650 = vpack.c.bf16 %v618, %v618
  %v651 = vpack.c.bf16 %v619, %v619
  %v652 = vpack.c.bf16 %v620, %v620
  %v653 = vpack.c.bf16 %v621, %v621
  %v654 = vpack.c.bf16 %v622, %v622
  %v655 = vpack.c.bf16 %v623, %v623
  %v656 = vpack.c.bf16 %v624, %v624
  %v657 = vpack.c.bf16 %v625, %v625
  %v658 = vpack.c.bf16 %v626, %v626
  %v691 = vunpack.c.l.b16 %v627
  %v692 = vunpack.c.l.b16 %v628
  %v693 = vunpack.c.l.b16 %v629
  %v694 = vunpack.c.l.b16 %v630
  %v695 = vunpack.c.l.b16 %v631
  %v696 = vunpack.c.l.b16 %v632
  %v697 = vunpack.c.l.b16 %v633
  %v698 = vunpack.c.l.b16 %v634
  %v699 = vunpack.c.l.b16 %v635
  %v700 = vunpack.c.l.b16 %v636
  %v701 = vunpack.c.l.b16 %v637
  %v702 = vunpack.c.l.b16 %v638
  %v703 = vunpack.c.l.b16 %v639
  %v704 = vunpack.c.l.b16 %v640
  %v705 = vunpack.c.l.b16 %v641
  %v706 = vunpack.c.l.b16 %v642
  %v707 = vunpack.c.l.b16 %v643
  %v708 = vunpack.c.l.b16 %v644
  %v709 = vunpack.c.l.b16 %v645
  %v710 = vunpack.c.l.b16 %v646
  %v711 = vunpack.c.l.b16 %v647
  %v712 = vunpack.c.l.b16 %v648
  %v713 = vunpack.c.l.b16 %v649
  %v714 = vunpack.c.l.b16 %v650
  %v715 = vunpack.c.l.b16 %v651
  %v716 = vunpack.c.l.b16 %v652
  %v717 = vunpack.c.l.b16 %v653
  %v718 = vunpack.c.l.b16 %v654
  %v719 = vunpack.c.l.b16 %v655
  %v720 = vunpack.c.l.b16 %v656
  %v721 = vunpack.c.l.b16 %v657
  %v722 = vunpack.c.l.b16 %v658
  %v723 = vpack.c.b16 %v692, %v691
  %v724 = vpack.c.b16 %v694, %v693
  %v725 = vpack.c.b16 %v696, %v695
  %v726 = vpack.c.b16 %v698, %v697
  %v727 = vpack.c.b16 %v700, %v699
  %v728 = vpack.c.b16 %v702, %v701
  %v729 = vpack.c.b16 %v704, %v703
  %v730 = vpack.c.b16 %v706, %v705
  %v731 = vpack.c.b16 %v708, %v707
  %v732 = vpack.c.b16 %v710, %v709
  %v733 = vpack.c.b16 %v712, %v711
  %v734 = vpack.c.b16 %v714, %v713
  %v735 = vpack.c.b16 %v716, %v715
  %v736 = vpack.c.b16 %v718, %v717
  %v737 = vpack.c.b16 %v720, %v719
  %v738 = vpack.c.b16 %v722, %v721
  %v755 = vld [vmem:[%s3] sm:$0xf]
  %v756 = vld [vmem:[%s3 + $0x4] sm:$0xf]
  %v757 = vld [vmem:[%s3 + $0x8] sm:$0xf]
  %v758 = vld [vmem:[%s3 + $0xc] sm:$0xf]
  %v759 = vld [vmem:[%s3 + $0x10] sm:$0xf]
  %v760 = vld [vmem:[%s3 + $0x14] sm:$0xf]
  %v761 = vld [vmem:[%s3 + $0x18] sm:$0xf]
  %v762 = vld [vmem:[%s3 + $0x1c] sm:$0xf]
  %v763 = vld [vmem:[%s3 + $0x20] sm:$0xf]
  %v764 = vld [vmem:[%s3 + $0x24] sm:$0xf]
  %v765 = vld [vmem:[%s3 + $0x28] sm:$0xf]
  %v766 = vld [vmem:[%s3 + $0x2c] sm:$0xf]
  %v767 = vld [vmem:[%s3 + $0x30] sm:$0xf]
  %v768 = vld [vmem:[%s3 + $0x34] sm:$0xf]
  %v769 = vld [vmem:[%s3 + $0x38] sm:$0xf]
  %v770 = vld [vmem:[%s3 + $0x3c] sm:$0xf]
  %v771 = vld [vmem:[%s3 + $0x40] sm:$0xf]
  %v772 = vld [vmem:[%s3 + $0x44] sm:$0xf]
  %v773 = vld [vmem:[%s3 + $0x48] sm:$0xf]
  %v774 = vld [vmem:[%s3 + $0x4c] sm:$0xf]
  %v775 = vld [vmem:[%s3 + $0x50] sm:$0xf]
  %v776 = vld [vmem:[%s3 + $0x54] sm:$0xf]
  %v777 = vld [vmem:[%s3 + $0x58] sm:$0xf]
  %v778 = vld [vmem:[%s3 + $0x5c] sm:$0xf]
  %v779 = vld [vmem:[%s3 + $0x60] sm:$0xf]
  %v780 = vld [vmem:[%s3 + $0x64] sm:$0xf]
  %v781 = vld [vmem:[%s3 + $0x68] sm:$0xf]
  %v782 = vld [vmem:[%s3 + $0x6c] sm:$0xf]
  %v783 = vld [vmem:[%s3 + $0x70] sm:$0xf]
  %v784 = vld [vmem:[%s3 + $0x74] sm:$0xf]
  %v785 = vld [vmem:[%s3 + $0x78] sm:$0xf]
  %v786 = vld [vmem:[%s3 + $0x7c] sm:$0xf]
  %v787 = vld [vmem:[%s3 + $0x80] sm:$0xf]
  %v788 = vld [vmem:[%s3 + $0x84] sm:$0xf]
  %v789 = vld [vmem:[%s3 + $0x88] sm:$0xf]
  %v790 = vld [vmem:[%s3 + $0x8c] sm:$0xf]
  %v791 = vld [vmem:[%s3 + $0x90] sm:$0xf]
  %v792 = vld [vmem:[%s3 + $0x94] sm:$0xf]
  %v793 = vld [vmem:[%s3 + $0x98] sm:$0xf]
  %v794 = vld [vmem:[%s3 + $0x9c] sm:$0xf]
  %v795 = vld [vmem:[%s3 + $0xa0] sm:$0xf]
  %v796 = vld [vmem:[%s3 + $0xa4] sm:$0xf]
  %v797 = vld [vmem:[%s3 + $0xa8] sm:$0xf]
  %v798 = vld [vmem:[%s3 + $0xac] sm:$0xf]
  %v799 = vld [vmem:[%s3 + $0xb0] sm:$0xf]
  %v800 = vld [vmem:[%s3 + $0xb4] sm:$0xf]
  %v801 = vld [vmem:[%s3 + $0xb8] sm:$0xf]
  %v802 = vld [vmem:[%s3 + $0xbc] sm:$0xf]
  %v803 = vld [vmem:[%s4] sm:$0x1]
  %v805 = vperm.slane %v803, 0
  %v855 = vunpack.c.l.b16 %v755
  %v856 = vunpack.c.l.b16 %v756
  %v857 = vunpack.c.l.b16 %v757
  %v858 = vunpack.c.l.b16 %v758
  %v859 = vunpack.c.l.b16 %v759
  %v860 = vunpack.c.l.b16 %v760
  %v861 = vunpack.c.l.b16 %v761
  %v862 = vunpack.c.l.b16 %v762
  %v863 = vunpack.c.l.b16 %v763
  %v864 = vunpack.c.l.b16 %v764
  %v865 = vunpack.c.l.b16 %v765
  %v866 = vunpack.c.l.b16 %v766
  %v867 = vunpack.c.l.b16 %v767
  %v868 = vunpack.c.l.b16 %v768
  %v869 = vunpack.c.l.b16 %v769
  %v870 = vunpack.c.l.b16 %v770
  %v871 = vunpack.c.l.b16 %v771
  %v872 = vunpack.c.l.b16 %v772
  %v873 = vunpack.c.l.b16 %v773
  %v874 = vunpack.c.l.b16 %v774
  %v875 = vunpack.c.l.b16 %v775
  %v876 = vunpack.c.l.b16 %v776
  %v877 = vunpack.c.l.b16 %v777
  %v878 = vunpack.c.l.b16 %v778
  %v879 = vunpack.c.l.b16 %v779
  %v880 = vunpack.c.l.b16 %v780
  %v881 = vunpack.c.l.b16 %v781
  %v882 = vunpack.c.l.b16 %v782
  %v883 = vunpack.c.l.b16 %v783
  %v884 = vunpack.c.l.b16 %v784
  %v885 = vunpack.c.l.b16 %v785
  %v886 = vunpack.c.l.b16 %v786
  %v887 = vunpack.c.l.b16 %v787
  %v888 = vunpack.c.l.b16 %v788
  %v889 = vunpack.c.l.b16 %v789
  %v890 = vunpack.c.l.b16 %v790
  %v891 = vunpack.c.l.b16 %v791
  %v892 = vunpack.c.l.b16 %v792
  %v893 = vunpack.c.l.b16 %v793
  %v894 = vunpack.c.l.b16 %v794
  %v895 = vunpack.c.l.b16 %v795
  %v896 = vunpack.c.l.b16 %v796
  %v897 = vunpack.c.l.b16 %v797
  %v898 = vunpack.c.l.b16 %v798
  %v899 = vunpack.c.l.b16 %v799
  %v900 = vunpack.c.l.b16 %v800
  %v901 = vunpack.c.l.b16 %v801
  %v902 = vunpack.c.l.b16 %v802
  %v903 = vpack.c.b16 %v856, %v855
  %v904 = vpack.c.b16 %v858, %v857
  %v905 = vpack.c.b16 %v860, %v859
  %v906 = vpack.c.b16 %v862, %v861
  %v907 = vpack.c.b16 %v864, %v863
  %v908 = vpack.c.b16 %v866, %v865
  %v909 = vpack.c.b16 %v868, %v867
  %v910 = vpack.c.b16 %v870, %v869
  %v911 = vpack.c.b16 %v872, %v871
  %v912 = vpack.c.b16 %v874, %v873
  %v913 = vpack.c.b16 %v876, %v875
  %v914 = vpack.c.b16 %v878, %v877
  %v915 = vpack.c.b16 %v880, %v879
  %v916 = vpack.c.b16 %v882, %v881
  %v917 = vpack.c.b16 %v884, %v883
  %v918 = vpack.c.b16 %v886, %v885
  %v919 = vpack.c.b16 %v888, %v887
  %v920 = vpack.c.b16 %v890, %v889
  %v921 = vpack.c.b16 %v892, %v891
  %v922 = vpack.c.b16 %v894, %v893
  %v923 = vpack.c.b16 %v896, %v895
  %v924 = vpack.c.b16 %v898, %v897
  %v925 = vpack.c.b16 %v900, %v899
  %v926 = vpack.c.b16 %v902, %v901
  %951 = vmatpush.bf16.msra.mxu0 %v910
  %952 = vmatpush.bf16.msra.mxu0 %v909
  %953 = vmatpush.bf16.msra.mxu0 %v908
  %954 = vmatpush.bf16.msra.mxu0 %v907
  %955 = vmatpush.bf16.msra.mxu0 %v906
  %956 = vmatpush.bf16.msra.mxu0 %v905
  %957 = vmatpush.bf16.msra.mxu0 %v904
  %958 = vmatpush.bf16.msra.mxu0 %v903
  %959 = vmatmul.bf16.gmra.mxu0 0
  %v960 = vpop.f32.mrf.mxu0
  %v961 = vadd.f32 %v805, %v960
  %v962 = vpop.f32.mrf.mxu0
  %v963 = vadd.f32 %v805, %v962
  %964 = vmatmul.bf16.gmra.mxu0 %v724
  %v965 = vpop.f32.mrf.mxu0
  %v966 = vadd.f32 %v805, %v965
  %v967 = vpop.f32.mrf.mxu0
  %v968 = vadd.f32 %v805, %v967
  %969 = vmatmul.bf16.gmra.mxu0 %v726
  %v970 = vpop.f32.mrf.mxu0
  %v971 = vadd.f32 %v805, %v970
  %v972 = vpop.f32.mrf.mxu0
  %v973 = vadd.f32 %v805, %v972
  %974 = vmatmul.bf16.gmra.mxu0 %v728
  %v975 = vpop.f32.mrf.mxu0
  %v976 = vadd.f32 %v805, %v975
  %v977 = vpop.f32.mrf.mxu0
  %v978 = vadd.f32 %v805, %v977
  %979 = vmatmul.bf16.gmra.mxu0 %v730
  %v980 = vpop.f32.mrf.mxu0
  %v981 = vadd.f32 %v805, %v980
  %v982 = vpop.f32.mrf.mxu0
  %v983 = vadd.f32 %v805, %v982
  %984 = vmatmul.bf16.gmra.mxu0 %v732
  %v985 = vpop.f32.mrf.mxu0
  %v986 = vadd.f32 %v805, %v985
  %v987 = vpop.f32.mrf.mxu0
  %v988 = vadd.f32 %v805, %v987
  %989 = vmatmul.bf16.gmra.mxu0 %v734
  %v990 = vpop.f32.mrf.mxu0
  %v991 = vadd.f32 %v805, %v990
  %v992 = vpop.f32.mrf.mxu0
  %v993 = vadd.f32 %v805, %v992
  %994 = vmatmul.bf16.gmra.mxu0 %v736
  %v995 = vpop.f32.mrf.mxu0
  %v996 = vadd.f32 %v805, %v995
  %v997 = vpop.f32.mrf.mxu0
  %v998 = vadd.f32 %v805, %v997
  %999 = vdwg.mxu0
  %1000 = vmatpush.bf16.msra.mxu0 %v918
  %1001 = vmatpush.bf16.msra.mxu0 %v917
  %1002 = vmatpush.bf16.msra.mxu0 %v916
  %1003 = vmatpush.bf16.msra.mxu0 %v915
  %1004 = vmatpush.bf16.msra.mxu0 %v914
  %1005 = vmatpush.bf16.msra.mxu0 %v913
  %1006 = vmatpush.bf16.msra.mxu0 %v912
  %1007 = vmatpush.bf16.msra.mxu0 %v911
  %1008 = vmatmul.bf16.gmra.mxu0 %v723
  %v1009 = vpop.f32.mrf.mxu0
  %v1010 = vadd.f32 %v961, %v1009
  %v1011 = vpop.f32.mrf.mxu0
  %v1012 = vadd.f32 %v963, %v1011
  %1013 = vmatmul.bf16.gmra.mxu0 %v725
  %v1014 = vpop.f32.mrf.mxu0
  %v1015 = vadd.f32 %v966, %v1014
  %v1016 = vpop.f32.mrf.mxu0
  %v1017 = vadd.f32 %v968, %v1016
  %1018 = vmatmul.bf16.gmra.mxu0 %v727
  %v1019 = vpop.f32.mrf.mxu0
  %v1020 = vadd.f32 %v971, %v1019
  %v1021 = vpop.f32.mrf.mxu0
  %v1022 = vadd.f32 %v973, %v1021
  %1023 = vmatmul.bf16.gmra.mxu0 %v729
  %v1024 = vpop.f32.mrf.mxu0
  %v1025 = vadd.f32 %v976, %v1024
  %v1026 = vpop.f32.mrf.mxu0
  %v1027 = vadd.f32 %v978, %v1026
  %1028 = vmatmul.bf16.gmra.mxu0 %v731
  %v1029 = vpop.f32.mrf.mxu0
  %v1030 = vadd.f32 %v981, %v1029
  %v1031 = vpop.f32.mrf.mxu0
  %v1032 = vadd.f32 %v983, %v1031
  %1033 = vmatmul.bf16.gmra.mxu0 %v733
  %v1034 = vpop.f32.mrf.mxu0
  %v1035 = vadd.f32 %v986, %v1034
  %v1036 = vpop.f32.mrf.mxu0
  %v1037 = vadd.f32 %v988, %v1036
  %1038 = vmatmul.bf16.gmra.mxu0 %v735
  %v1039 = vpop.f32.mrf.mxu0
  %v1040 = vadd.f32 %v991, %v1039
  %v1041 = vpop.f32.mrf.mxu0
  %v1042 = vadd.f32 %v993, %v1041
  %1043 = vmatmul.bf16.gmra.mxu0 %v737
  %v1044 = vpop.f32.mrf.mxu0
  %v1045 = vadd.f32 %v996, %v1044
  %v1046 = vpop.f32.mrf.mxu0
  %v1047 = vadd.f32 %v998, %v1046
  %1048 = vdwg.mxu0
  %1049 = vmatpush.bf16.msra.mxu0 %v926
  %1050 = vmatpush.bf16.msra.mxu0 %v925
  %1051 = vmatpush.bf16.msra.mxu0 %v924
  %1052 = vmatpush.bf16.msra.mxu0 %v923
  %1053 = vmatpush.bf16.msra.mxu0 %v922
  %1054 = vmatpush.bf16.msra.mxu0 %v921
  %1055 = vmatpush.bf16.msra.mxu0 %v920
  %1056 = vmatpush.bf16.msra.mxu0 %v919
  %1057 = vmatmul.bf16.gmra.mxu0 %v724
  %v1058 = vpop.f32.mrf.mxu0
  %v1059 = vadd.f32 %v1010, %v1058
  %v1060 = vpop.f32.mrf.mxu0
  %v1061 = vadd.f32 %v1012, %v1060
  %1062 = vmatmul.bf16.gmra.mxu0 %v726
  %v1063 = vpop.f32.mrf.mxu0
  %v1064 = vadd.f32 %v1015, %v1063
  %v1065 = vpop.f32.mrf.mxu0
  %v1066 = vadd.f32 %v1017, %v1065
  %1067 = vmatmul.bf16.gmra.mxu0 %v728
  %v1068 = vpop.f32.mrf.mxu0
  %v1069 = vadd.f32 %v1020, %v1068
  %v1070 = vpop.f32.mrf.mxu0
  %v1071 = vadd.f32 %v1022, %v1070
  %1072 = vmatmul.bf16.gmra.mxu0 %v730
  %v1073 = vpop.f32.mrf.mxu0
  %v1074 = vadd.f32 %v1025, %v1073
  %v1075 = vpop.f32.mrf.mxu0
  %v1076 = vadd.f32 %v1027, %v1075
  %1077 = vmatmul.bf16.gmra.mxu0 %v732
  %v1078 = vpop.f32.mrf.mxu0
  %v1079 = vadd.f32 %v1030, %v1078
  %v1080 = vpop.f32.mrf.mxu0
  %v1081 = vadd.f32 %v1032, %v1080
  %1082 = vmatmul.bf16.gmra.mxu0 %v734
  %v1083 = vpop.f32.mrf.mxu0
  %v1084 = vadd.f32 %v1035, %v1083
  %v1085 = vpop.f32.mrf.mxu0
  %v1086 = vadd.f32 %v1037, %v1085
  %1087 = vmatmul.bf16.gmra.mxu0 %v736
  %v1088 = vpop.f32.mrf.mxu0
  %v1089 = vadd.f32 %v1040, %v1088
  %v1090 = vpop.f32.mrf.mxu0
  %v1091 = vadd.f32 %v1042, %v1090
  %1092 = vmatmul.bf16.gmra.mxu0 %v738
  %v1093 = vpop.f32.mrf.mxu0
  %v1094 = vadd.f32 %v1045, %v1093
  %v1095 = vpop.f32.mrf.mxu0
  %v1096 = vadd.f32 %v1047, %v1095
  %1097 = vdwg.mxu0
  %v1098 = vmax.f32 %v1059, 0.0
  %v1099 = vmax.f32 %v1061, 0.0
  %v1100 = vmax.f32 %v1064, 0.0
  %v1101 = vmax.f32 %v1066, 0.0
  %v1102 = vmax.f32 %v1069, 0.0
  %v1103 = vmax.f32 %v1071, 0.0
  %v1104 = vmax.f32 %v1074, 0.0
  %v1105 = vmax.f32 %v1076, 0.0
  %v1106 = vmax.f32 %v1079, 0.0
  %v1107 = vmax.f32 %v1081, 0.0
  %v1108 = vmax.f32 %v1084, 0.0
  %v1109 = vmax.f32 %v1086, 0.0
  %v1110 = vmax.f32 %v1089, 0.0
  %v1111 = vmax.f32 %v1091, 0.0
  %v1112 = vmax.f32 %v1094, 0.0
  %v1113 = vmax.f32 %v1096, 0.0
  %v1114 = vpack.c.bf16 %v1098, %v1098
  %v1115 = vpack.c.bf16 %v1099, %v1099
  %v1116 = vpack.c.bf16 %v1100, %v1100
  %v1117 = vpack.c.bf16 %v1101, %v1101
  %v1118 = vpack.c.bf16 %v1102, %v1102
  %v1119 = vpack.c.bf16 %v1103, %v1103
  %v1120 = vpack.c.bf16 %v1104, %v1104
  %v1121 = vpack.c.bf16 %v1105, %v1105
  %v1122 = vpack.c.bf16 %v1106, %v1106
  %v1123 = vpack.c.bf16 %v1107, %v1107
  %v1124 = vpack.c.bf16 %v1108, %v1108
  %v1125 = vpack.c.bf16 %v1109, %v1109
  %v1126 = vpack.c.bf16 %v1110, %v1110
  %v1127 = vpack.c.bf16 %v1111, %v1111
  %v1128 = vpack.c.bf16 %v1112, %v1112
  %v1129 = vpack.c.bf16 %v1113, %v1113
  %v1146 = vunpack.c.l.b16 %v1114
  %v1147 = vunpack.c.l.b16 %v1115
  %v1148 = vunpack.c.l.b16 %v1116
  %v1149 = vunpack.c.l.b16 %v1117
  %v1150 = vunpack.c.l.b16 %v1118
  %v1151 = vunpack.c.l.b16 %v1119
  %v1152 = vunpack.c.l.b16 %v1120
  %v1153 = vunpack.c.l.b16 %v1121
  %v1154 = vunpack.c.l.b16 %v1122
  %v1155 = vunpack.c.l.b16 %v1123
  %v1156 = vunpack.c.l.b16 %v1124
  %v1157 = vunpack.c.l.b16 %v1125
  %v1158 = vunpack.c.l.b16 %v1126
  %v1159 = vunpack.c.l.b16 %v1127
  %v1160 = vunpack.c.l.b16 %v1128
  %v1161 = vunpack.c.l.b16 %v1129
  %v1162 = vpack.c.b16 %v1147, %v1146
  %v1163 = vpack.c.b16 %v1149, %v1148
  %v1164 = vpack.c.b16 %v1151, %v1150
  %v1165 = vpack.c.b16 %v1153, %v1152
  %v1166 = vpack.c.b16 %v1155, %v1154
  %v1167 = vpack.c.b16 %v1157, %v1156
  %v1168 = vpack.c.b16 %v1159, %v1158
  %v1169 = vpack.c.b16 %v1161, %v1160
  %v1178 = vld [vmem:[%s5] sm:$0xf]
  %v1179 = vld [vmem:[%s5 + $0x4] sm:$0xf]
  %v1180 = vld [vmem:[%s5 + $0x8] sm:$0xf]
  %v1181 = vld [vmem:[%s5 + $0xc] sm:$0xf]
  %v1182 = vld [vmem:[%s5 + $0x10] sm:$0xf]
  %v1183 = vld [vmem:[%s5 + $0x14] sm:$0xf]
  %v1184 = vld [vmem:[%s5 + $0x18] sm:$0xf]
  %v1185 = vld [vmem:[%s5 + $0x1c] sm:$0xf]
  %v1186 = vld [vmem:[%s5 + $0x20] sm:$0xf]
  %v1187 = vld [vmem:[%s5 + $0x24] sm:$0xf]
  %v1188 = vld [vmem:[%s5 + $0x28] sm:$0xf]
  %v1189 = vld [vmem:[%s5 + $0x2c] sm:$0xf]
  %v1190 = vld [vmem:[%s5 + $0x30] sm:$0xf]
  %v1191 = vld [vmem:[%s5 + $0x34] sm:$0xf]
  %v1192 = vld [vmem:[%s5 + $0x38] sm:$0xf]
  %v1193 = vld [vmem:[%s5 + $0x3c] sm:$0xf]
  %v1194 = vld [vmem:[%s5 + $0x40] sm:$0xf]
  %v1195 = vld [vmem:[%s5 + $0x44] sm:$0xf]
  %v1196 = vld [vmem:[%s5 + $0x48] sm:$0xf]
  %v1197 = vld [vmem:[%s5 + $0x4c] sm:$0xf]
  %v1198 = vld [vmem:[%s5 + $0x50] sm:$0xf]
  %v1199 = vld [vmem:[%s5 + $0x54] sm:$0xf]
  %v1200 = vld [vmem:[%s5 + $0x58] sm:$0xf]
  %v1201 = vld [vmem:[%s5 + $0x5c] sm:$0xf]
  %v1202 = vld [vmem:[%s5 + $0x60] sm:$0xf]
  %v1203 = vld [vmem:[%s5 + $0x64] sm:$0xf]
  %v1204 = vld [vmem:[%s5 + $0x68] sm:$0xf]
  %v1205 = vld [vmem:[%s5 + $0x6c] sm:$0xf]
  %v1206 = vld [vmem:[%s5 + $0x70] sm:$0xf]
  %v1207 = vld [vmem:[%s5 + $0x74] sm:$0xf]
  %v1208 = vld [vmem:[%s5 + $0x78] sm:$0xf]
  %v1209 = vld [vmem:[%s5 + $0x7c] sm:$0xf]
  %v1210 = vld [vmem:[%s5 + $0x80] sm:$0xf]
  %v1211 = vld [vmem:[%s5 + $0x84] sm:$0xf]
  %v1212 = vld [vmem:[%s5 + $0x88] sm:$0xf]
  %v1213 = vld [vmem:[%s5 + $0x8c] sm:$0xf]
  %v1214 = vld [vmem:[%s5 + $0x90] sm:$0xf]
  %v1215 = vld [vmem:[%s5 + $0x94] sm:$0xf]
  %v1216 = vld [vmem:[%s5 + $0x98] sm:$0xf]
  %v1217 = vld [vmem:[%s5 + $0x9c] sm:$0xf]
  %v1218 = vld [vmem:[%s5 + $0xa0] sm:$0xf]
  %v1219 = vld [vmem:[%s5 + $0xa4] sm:$0xf]
  %v1220 = vld [vmem:[%s5 + $0xa8] sm:$0xf]
  %v1221 = vld [vmem:[%s5 + $0xac] sm:$0xf]
  %v1222 = vld [vmem:[%s5 + $0xb0] sm:$0xf]
  %v1223 = vld [vmem:[%s5 + $0xb4] sm:$0xf]
  %v1224 = vld [vmem:[%s5 + $0xb8] sm:$0xf]
  %v1225 = vld [vmem:[%s5 + $0xbc] sm:$0xf]
  %v1226 = vld [vmem:[%s6] sm:$0x1]
  %v1228 = vperm.slane %v1226, 0
  %v1278 = vunpack.c.l.b16 %v1178
  %v1279 = vunpack.c.l.b16 %v1179
  %v1280 = vunpack.c.l.b16 %v1180
  %v1281 = vunpack.c.l.b16 %v1181
  %v1282 = vunpack.c.l.b16 %v1182
  %v1283 = vunpack.c.l.b16 %v1183
  %v1284 = vunpack.c.l.b16 %v1184
  %v1285 = vunpack.c.l.b16 %v1185
  %v1286 = vunpack.c.l.b16 %v1186
  %v1287 = vunpack.c.l.b16 %v1187
  %v1288 = vunpack.c.l.b16 %v1188
  %v1289 = vunpack.c.l.b16 %v1189
  %v1290 = vunpack.c.l.b16 %v1190
  %v1291 = vunpack.c.l.b16 %v1191
  %v1292 = vunpack.c.l.b16 %v1192
  %v1293 = vunpack.c.l.b16 %v1193
  %v1294 = vunpack.c.l.b16 %v1194
  %v1295 = vunpack.c.l.b16 %v1195
  %v1296 = vunpack.c.l.b16 %v1196
  %v1297 = vunpack.c.l.b16 %v1197
  %v1298 = vunpack.c.l.b16 %v1198
  %v1299 = vunpack.c.l.b16 %v1199
  %v1300 = vunpack.c.l.b16 %v1200
  %v1301 = vunpack.c.l.b16 %v1201
  %v1302 = vunpack.c.l.b16 %v1202
  %v1303 = vunpack.c.l.b16 %v1203
  %v1304 = vunpack.c.l.b16 %v1204
  %v1305 = vunpack.c.l.b16 %v1205
  %v1306 = vunpack.c.l.b16 %v1206
  %v1307 = vunpack.c.l.b16 %v1207
  %v1308 = vunpack.c.l.b16 %v1208
  %v1309 = vunpack.c.l.b16 %v1209
  %v1310 = vunpack.c.l.b16 %v1210
  %v1311 = vunpack.c.l.b16 %v1211
  %v1312 = vunpack.c.l.b16 %v1212
  %v1313 = vunpack.c.l.b16 %v1213
  %v1314 = vunpack.c.l.b16 %v1214
  %v1315 = vunpack.c.l.b16 %v1215
  %v1316 = vunpack.c.l.b16 %v1216
  %v1317 = vunpack.c.l.b16 %v1217
  %v1318 = vunpack.c.l.b16 %v1218
  %v1319 = vunpack.c.l.b16 %v1219
  %v1320 = vunpack.c.l.b16 %v1220
  %v1321 = vunpack.c.l.b16 %v1221
  %v1322 = vunpack.c.l.b16 %v1222
  %v1323 = vunpack.c.l.b16 %v1223
  %v1324 = vunpack.c.l.b16 %v1224
  %v1325 = vunpack.c.l.b16 %v1225
  %v1326 = vpack.c.b16 %v1279, %v1278
  %v1327 = vpack.c.b16 %v1281, %v1280
  %v1328 = vpack.c.b16 %v1283, %v1282
  %v1329 = vpack.c.b16 %v1285, %v1284
  %v1330 = vpack.c.b16 %v1287, %v1286
  %v1331 = vpack.c.b16 %v1289, %v1288
  %v1332 = vpack.c.b16 %v1291, %v1290
  %v1333 = vpack.c.b16 %v1293, %v1292
  %v1334 = vpack.c.b16 %v1295, %v1294
  %v1335 = vpack.c.b16 %v1297, %v1296
  %v1336 = vpack.c.b16 %v1299, %v1298
  %v1337 = vpack.c.b16 %v1301, %v1300
  %v1338 = vpack.c.b16 %v1303, %v1302
  %v1339 = vpack.c.b16 %v1305, %v1304
  %v1340 = vpack.c.b16 %v1307, %v1306
  %v1341 = vpack.c.b16 %v1309, %v1308
  %v1342 = vpack.c.b16 %v1311, %v1310
  %v1343 = vpack.c.b16 %v1313, %v1312
  %v1344 = vpack.c.b16 %v1315, %v1314
  %v1345 = vpack.c.b16 %v1317, %v1316
  %v1346 = vpack.c.b16 %v1319, %v1318
  %v1347 = vpack.c.b16 %v1321, %v1320
  %v1348 = vpack.c.b16 %v1323, %v1322
  %v1349 = vpack.c.b16 %v1325, %v1324
  %1374 = vmatpush.bf16.msra.mxu0 %v1333
  %1375 = vmatpush.bf16.msra.mxu0 %v1332
  %1376 = vmatpush.bf16.msra.mxu0 %v1331
  %1377 = vmatpush.bf16.msra.mxu0 %v1330
  %1378 = vmatpush.bf16.msra.mxu0 %v1329
  %1379 = vmatpush.bf16.msra.mxu0 %v1328
  %1380 = vmatpush.bf16.msra.mxu0 %v1327
  %1381 = vmatpush.bf16.msra.mxu0 %v1326
  %1382 = vmatmul.bf16.gmra.mxu0 0
  %v1383 = vpop.f32.mrf.mxu0
  %v1384 = vadd.f32 %v1228, %v1383
  %v1385 = vpop.f32.mrf.mxu0
  %v1386 = vadd.f32 %v1228, %v1385
  %1387 = vmatmul.bf16.gmra.mxu0 %v1163
  %v1388 = vpop.f32.mrf.mxu0
  %v1389 = vadd.f32 %v1228, %v1388
  %v1390 = vpop.f32.mrf.mxu0
  %v1391 = vadd.f32 %v1228, %v1390
  %1392 = vmatmul.bf16.gmra.mxu0 %v1165
  %v1393 = vpop.f32.mrf.mxu0
  %v1394 = vadd.f32 %v1228, %v1393
  %v1395 = vpop.f32.mrf.mxu0
  %v1396 = vadd.f32 %v1228, %v1395
  %1397 = vmatmul.bf16.gmra.mxu0 %v1167
  %v1398 = vpop.f32.mrf.mxu0
  %v1399 = vadd.f32 %v1228, %v1398
  %v1400 = vpop.f32.mrf.mxu0
  %v1401 = vadd.f32 %v1228, %v1400
  %1402 = vdwg.mxu0
  %1403 = vmatpush.bf16.msra.mxu0 %v1341
  %1404 = vmatpush.bf16.msra.mxu0 %v1340
  %1405 = vmatpush.bf16.msra.mxu0 %v1339
  %1406 = vmatpush.bf16.msra.mxu0 %v1338
  %1407 = vmatpush.bf16.msra.mxu0 %v1337
  %1408 = vmatpush.bf16.msra.mxu0 %v1336
  %1409 = vmatpush.bf16.msra.mxu0 %v1335
  %1410 = vmatpush.bf16.msra.mxu0 %v1334
  %1411 = vmatmul.bf16.gmra.mxu0 %v1162
  %v1412 = vpop.f32.mrf.mxu0
  %v1413 = vadd.f32 %v1384, %v1412
  %v1414 = vpop.f32.mrf.mxu0
  %v1415 = vadd.f32 %v1386, %v1414
  %1416 = vmatmul.bf16.gmra.mxu0 %v1164
  %v1417 = vpop.f32.mrf.mxu0
  %v1418 = vadd.f32 %v1389, %v1417
  %v1419 = vpop.f32.mrf.mxu0
  %v1420 = vadd.f32 %v1391, %v1419
  %1421 = vmatmul.bf16.gmra.mxu0 %v1166
  %v1422 = vpop.f32.mrf.mxu0
  %v1423 = vadd.f32 %v1394, %v1422
  %v1424 = vpop.f32.mrf.mxu0
  %v1425 = vadd.f32 %v1396, %v1424
  %1426 = vmatmul.bf16.gmra.mxu0 %v1168
  %v1427 = vpop.f32.mrf.mxu0
  %v1428 = vadd.f32 %v1399, %v1427
  %v1429 = vpop.f32.mrf.mxu0
  %v1430 = vadd.f32 %v1401, %v1429
  %1431 = vdwg.mxu0
  %1432 = vmatpush.bf16.msra.mxu0 %v1349
  %1433 = vmatpush.bf16.msra.mxu0 %v1348
  %1434 = vmatpush.bf16.msra.mxu0 %v1347
  %1435 = vmatpush.bf16.msra.mxu0 %v1346
  %1436 = vmatpush.bf16.msra.mxu0 %v1345
  %1437 = vmatpush.bf16.msra.mxu0 %v1344
  %1438 = vmatpush.bf16.msra.mxu0 %v1343
  %1439 = vmatpush.bf16.msra.mxu0 %v1342
  %1440 = vmatmul.bf16.gmra.mxu0 %v1163
  %v1441 = vpop.f32.mrf.mxu0
  %v1442 = vadd.f32 %v1413, %v1441
  %v1443 = vpop.f32.mrf.mxu0
  %v1444 = vadd.f32 %v1415, %v1443
  %1445 = vmatmul.bf16.gmra.mxu0 %v1165
  %v1446 = vpop.f32.mrf.mxu0
  %v1447 = vadd.f32 %v1418, %v1446
  %v1448 = vpop.f32.mrf.mxu0
  %v1449 = vadd.f32 %v1420, %v1448
  %1450 = vmatmul.bf16.gmra.mxu0 %v1167
  %v1451 = vpop.f32.mrf.mxu0
  %v1452 = vadd.f32 %v1423, %v1451
  %v1453 = vpop.f32.mrf.mxu0
  %v1454 = vadd.f32 %v1425, %v1453
  %1455 = vmatmul.bf16.gmra.mxu0 %v1169
  %v1456 = vpop.f32.mrf.mxu0
  %v1457 = vadd.f32 %v1428, %v1456
  %v1458 = vpop.f32.mrf.mxu0
  %v1459 = vadd.f32 %v1430, %v1458
  %1460 = vdwg.mxu0
  %v1461 = vmax.f32 %v1442, 0.0
  %v1462 = vmax.f32 %v1444, 0.0
  %v1463 = vmax.f32 %v1447, 0.0
  %v1464 = vmax.f32 %v1449, 0.0
  %v1465 = vmax.f32 %v1452, 0.0
  %v1466 = vmax.f32 %v1454, 0.0
  %v1467 = vmax.f32 %v1457, 0.0
  %v1468 = vmax.f32 %v1459, 0.0
  %v1469 = vpack.c.bf16 %v1461, %v1461
  %v1470 = vpack.c.bf16 %v1462, %v1462
  %v1471 = vpack.c.bf16 %v1463, %v1463
  %v1472 = vpack.c.bf16 %v1464, %v1464
  %v1473 = vpack.c.bf16 %v1465, %v1465
  %v1474 = vpack.c.bf16 %v1466, %v1466
  %v1475 = vpack.c.bf16 %v1467, %v1467
  %v1476 = vpack.c.bf16 %v1468, %v1468
  %v1485 = vunpack.c.l.b16 %v1469
  %v1486 = vunpack.c.l.b16 %v1470
  %v1487 = vunpack.c.l.b16 %v1471
  %v1488 = vunpack.c.l.b16 %v1472
  %v1489 = vunpack.c.l.b16 %v1473
  %v1490 = vunpack.c.l.b16 %v1474
  %v1491 = vunpack.c.l.b16 %v1475
  %v1492 = vunpack.c.l.b16 %v1476
  %v1493 = vpack.c.b16 %v1486, %v1485
  %v1494 = vpack.c.b16 %v1488, %v1487
  %v1495 = vpack.c.b16 %v1490, %v1489
  %v1496 = vpack.c.b16 %v1492, %v1491
  %v1501 = vld [vmem:[%s7] sm:$0xf]
  %v1502 = vld [vmem:[%s7 + $0x4] sm:$0xf]
  %v1503 = vld [vmem:[%s7 + $0x8] sm:$0xf]
  %v1504 = vld [vmem:[%s7 + $0xc] sm:$0xf]
  %v1505 = vld [vmem:[%s7 + $0x10] sm:$0xf]
  %v1506 = vld [vmem:[%s7 + $0x14] sm:$0xf]
  %v1507 = vld [vmem:[%s7 + $0x18] sm:$0xf]
  %v1508 = vld [vmem:[%s7 + $0x1c] sm:$0xf]
  %v1509 = vld [vmem:[%s7 + $0x20] sm:$0xf]
  %v1510 = vld [vmem:[%s7 + $0x24] sm:$0xf]
  %v1511 = vld [vmem:[%s7 + $0x28] sm:$0xf]
  %v1512 = vld [vmem:[%s7 + $0x2c] sm:$0xf]
  %v1513 = vld [vmem:[%s7 + $0x30] sm:$0xf]
  %v1514 = vld [vmem:[%s7 + $0x34] sm:$0xf]
  %v1515 = vld [vmem:[%s7 + $0x38] sm:$0xf]
  %v1516 = vld [vmem:[%s7 + $0x3c] sm:$0xf]
  %v1517 = vld [vmem:[%s7 + $0x40] sm:$0xf]
  %v1518 = vld [vmem:[%s7 + $0x44] sm:$0xf]
  %v1519 = vld [vmem:[%s7 + $0x48] sm:$0xf]
  %v1520 = vld [vmem:[%s7 + $0x4c] sm:$0xf]
  %v1521 = vld [vmem:[%s7 + $0x50] sm:$0xf]
  %v1522 = vld [vmem:[%s7 + $0x54] sm:$0xf]
  %v1523 = vld [vmem:[%s7 + $0x58] sm:$0xf]
  %v1524 = vld [vmem:[%s7 + $0x5c] sm:$0xf]
  %v1525 = vld [vmem:[%s7 + $0x60] sm:$0xf]
  %v1526 = vld [vmem:[%s7 + $0x64] sm:$0xf]
  %v1527 = vld [vmem:[%s7 + $0x68] sm:$0xf]
  %v1528 = vld [vmem:[%s7 + $0x6c] sm:$0xf]
  %v1529 = vld [vmem:[%s7 + $0x70] sm:$0xf]
  %v1530 = vld [vmem:[%s7 + $0x74] sm:$0xf]
  %v1531 = vld [vmem:[%s7 + $0x78] sm:$0xf]
  %v1532 = vld [vmem:[%s7 + $0x7c] sm:$0xf]
  %v1533 = vld [vmem:[%s7 + $0x80] sm:$0xf]
  %v1534 = vld [vmem:[%s7 + $0x84] sm:$0xf]
  %v1535 = vld [vmem:[%s7 + $0x88] sm:$0xf]
  %v1536 = vld [vmem:[%s7 + $0x8c] sm:$0xf]
  %v1537 = vld [vmem:[%s7 + $0x90] sm:$0xf]
  %v1538 = vld [vmem:[%s7 + $0x94] sm:$0xf]
  %v1539 = vld [vmem:[%s7 + $0x98] sm:$0xf]
  %v1540 = vld [vmem:[%s7 + $0x9c] sm:$0xf]
  %v1541 = vld [vmem:[%s7 + $0xa0] sm:$0xf]
  %v1542 = vld [vmem:[%s7 + $0xa4] sm:$0xf]
  %v1543 = vld [vmem:[%s7 + $0xa8] sm:$0xf]
  %v1544 = vld [vmem:[%s7 + $0xac] sm:$0xf]
  %v1545 = vld [vmem:[%s7 + $0xb0] sm:$0xf]
  %v1546 = vld [vmem:[%s7 + $0xb4] sm:$0xf]
  %v1547 = vld [vmem:[%s7 + $0xb8] sm:$0xf]
  %v1548 = vld [vmem:[%s7 + $0xbc] sm:$0xf]
  %v1549 = vld [vmem:[%s8] sm:$0x1]
  %v1551 = vperm.slane %v1549, 0
  %v1601 = vunpack.c.l.b16 %v1501
  %v1602 = vunpack.c.l.b16 %v1502
  %v1603 = vunpack.c.l.b16 %v1503
  %v1604 = vunpack.c.l.b16 %v1504
  %v1605 = vunpack.c.l.b16 %v1505
  %v1606 = vunpack.c.l.b16 %v1506
  %v1607 = vunpack.c.l.b16 %v1507
  %v1608 = vunpack.c.l.b16 %v1508
  %v1609 = vunpack.c.l.b16 %v1509
  %v1610 = vunpack.c.l.b16 %v1510
  %v1611 = vunpack.c.l.b16 %v1511
  %v1612 = vunpack.c.l.b16 %v1512
  %v1613 = vunpack.c.l.b16 %v1513
  %v1614 = vunpack.c.l.b16 %v1514
  %v1615 = vunpack.c.l.b16 %v1515
  %v1616 = vunpack.c.l.b16 %v1516
  %v1617 = vunpack.c.l.b16 %v1517
  %v1618 = vunpack.c.l.b16 %v1518
  %v1619 = vunpack.c.l.b16 %v1519
  %v1620 = vunpack.c.l.b16 %v1520
  %v1621 = vunpack.c.l.b16 %v1521
  %v1622 = vunpack.c.l.b16 %v1522
  %v1623 = vunpack.c.l.b16 %v1523
  %v1624 = vunpack.c.l.b16 %v1524
  %v1625 = vunpack.c.l.b16 %v1525
  %v1626 = vunpack.c.l.b16 %v1526
  %v1627 = vunpack.c.l.b16 %v1527
  %v1628 = vunpack.c.l.b16 %v1528
  %v1629 = vunpack.c.l.b16 %v1529
  %v1630 = vunpack.c.l.b16 %v1530
  %v1631 = vunpack.c.l.b16 %v1531
  %v1632 = vunpack.c.l.b16 %v1532
  %v1633 = vunpack.c.l.b16 %v1533
  %v1634 = vunpack.c.l.b16 %v1534
  %v1635 = vunpack.c.l.b16 %v1535
  %v1636 = vunpack.c.l.b16 %v1536
  %v1637 = vunpack.c.l.b16 %v1537
  %v1638 = vunpack.c.l.b16 %v1538
  %v1639 = vunpack.c.l.b16 %v1539
  %v1640 = vunpack.c.l.b16 %v1540
  %v1641 = vunpack.c.l.b16 %v1541
  %v1642 = vunpack.c.l.b16 %v1542
  %v1643 = vunpack.c.l.b16 %v1543
  %v1644 = vunpack.c.l.b16 %v1544
  %v1645 = vunpack.c.l.b16 %v1545
  %v1646 = vunpack.c.l.b16 %v1546
  %v1647 = vunpack.c.l.b16 %v1547
  %v1648 = vunpack.c.l.b16 %v1548
  %v1649 = vpack.c.b16 %v1602, %v1601
  %v1650 = vpack.c.b16 %v1604, %v1603
  %v1651 = vpack.c.b16 %v1606, %v1605
  %v1652 = vpack.c.b16 %v1608, %v1607
  %v1653 = vpack.c.b16 %v1610, %v1609
  %v1654 = vpack.c.b16 %v1612, %v1611
  %v1655 = vpack.c.b16 %v1614, %v1613
  %v1656 = vpack.c.b16 %v1616, %v1615
  %v1657 = vpack.c.b16 %v1618, %v1617
  %v1658 = vpack.c.b16 %v1620, %v1619
  %v1659 = vpack.c.b16 %v1622, %v1621
  %v1660 = vpack.c.b16 %v1624, %v1623
  %v1661 = vpack.c.b16 %v1626, %v1625
  %v1662 = vpack.c.b16 %v1628, %v1627
  %v1663 = vpack.c.b16 %v1630, %v1629
  %v1664 = vpack.c.b16 %v1632, %v1631
  %v1665 = vpack.c.b16 %v1634, %v1633
  %v1666 = vpack.c.b16 %v1636, %v1635
  %v1667 = vpack.c.b16 %v1638, %v1637
  %v1668 = vpack.c.b16 %v1640, %v1639
  %v1669 = vpack.c.b16 %v1642, %v1641
  %v1670 = vpack.c.b16 %v1644, %v1643
  %v1671 = vpack.c.b16 %v1646, %v1645
  %v1672 = vpack.c.b16 %v1648, %v1647
  %1697 = vmatpush.bf16.msra.mxu0 %v1656
  %1698 = vmatpush.bf16.msra.mxu0 %v1655
  %1699 = vmatpush.bf16.msra.mxu0 %v1654
  %1700 = vmatpush.bf16.msra.mxu0 %v1653
  %1701 = vmatpush.bf16.msra.mxu0 %v1652
  %1702 = vmatpush.bf16.msra.mxu0 %v1651
  %1703 = vmatpush.bf16.msra.mxu0 %v1650
  %1704 = vmatpush.bf16.msra.mxu0 %v1649
  %1705 = vmatmul.bf16.gmra.mxu0 0
  %v1706 = vpop.f32.mrf.mxu0
  %v1707 = vadd.f32 %v1551, %v1706
  %v1708 = vpop.f32.mrf.mxu0
  %v1709 = vadd.f32 %v1551, %v1708
  %1710 = vmatmul.bf16.gmra.mxu0 %v1494
  %v1711 = vpop.f32.mrf.mxu0
  %v1712 = vadd.f32 %v1551, %v1711
  %v1713 = vpop.f32.mrf.mxu0
  %v1714 = vadd.f32 %v1551, %v1713
  %1715 = vdwg.mxu0
  %1716 = vmatpush.bf16.msra.mxu0 %v1664
  %1717 = vmatpush.bf16.msra.mxu0 %v1663
  %1718 = vmatpush.bf16.msra.mxu0 %v1662
  %1719 = vmatpush.bf16.msra.mxu0 %v1661
  %1720 = vmatpush.bf16.msra.mxu0 %v1660
  %1721 = vmatpush.bf16.msra.mxu0 %v1659
  %1722 = vmatpush.bf16.msra.mxu0 %v1658
  %1723 = vmatpush.bf16.msra.mxu0 %v1657
  %1724 = vmatmul.bf16.gmra.mxu0 %v1493
  %v1725 = vpop.f32.mrf.mxu0
  %v1726 = vadd.f32 %v1707, %v1725
  %v1727 = vpop.f32.mrf.mxu0
  %v1728 = vadd.f32 %v1709, %v1727
  %1729 = vmatmul.bf16.gmra.mxu0 %v1495
  %v1730 = vpop.f32.mrf.mxu0
  %v1731 = vadd.f32 %v1712, %v1730
  %v1732 = vpop.f32.mrf.mxu0
  %v1733 = vadd.f32 %v1714, %v1732
  %1734 = vdwg.mxu0
  %1735 = vmatpush.bf16.msra.mxu0 %v1672
  %1736 = vmatpush.bf16.msra.mxu0 %v1671
  %1737 = vmatpush.bf16.msra.mxu0 %v1670
  %1738 = vmatpush.bf16.msra.mxu0 %v1669
  %1739 = vmatpush.bf16.msra.mxu0 %v1668
  %1740 = vmatpush.bf16.msra.mxu0 %v1667
  %1741 = vmatpush.bf16.msra.mxu0 %v1666
  %1742 = vmatpush.bf16.msra.mxu0 %v1665
  %1743 = vmatmul.bf16.gmra.mxu0 %v1494
  %v1744 = vpop.f32.mrf.mxu0
  %v1745 = vadd.f32 %v1726, %v1744
  %v1746 = vpop.f32.mrf.mxu0
  %v1747 = vadd.f32 %v1728, %v1746
  %1748 = vmatmul.bf16.gmra.mxu0 %v1496
  %v1749 = vpop.f32.mrf.mxu0
  %v1750 = vadd.f32 %v1731, %v1749
  %v1751 = vpop.f32.mrf.mxu0
  %v1752 = vadd.f32 %v1733, %v1751
  %1753 = vdwg.mxu0
  %v1754 = vmax.f32 %v1745, 0.0
  %v1755 = vmax.f32 %v1747, 0.0
  %v1756 = vmax.f32 %v1750, 0.0
  %v1757 = vmax.f32 %v1752, 0.0
  %1758 = vst [vmem:[%s9] sm:$0xff] %v1754
  %1759 = vst [vmem:[%s9 + $0x8] sm:$0xff] %v1755
  %1760 = vst [vmem:[%s9 + $0x10] sm:$0xff] %v1756
  %1761 = vst [vmem:[%s9 + $0x18] sm:$0xff] %v1757
  // Predicated region
  $region38: #{feature_extract.1} parent=0 // pred_check
    _
  $region39: #{feature_extract.1} parent=0 // pred_check_branch
    %1763 = sbr.rel (0) target = $region41
  $region40: #{feature_extract.1} parent=0 // pred_region
    _
  $region41: #{feature_extract.1} parent=0 // pred_fallthru
    _
  // Predicated region
  $region42: #{feature_extract.1} parent=0 // pred_check
    _
  $region43: #{feature_extract.1} parent=0 // pred_check_branch
    %1765 = sbr.rel (0) target = $region45
  $region44: #{feature_extract.1} parent=0 // pred_region
    _
  $region45: #{feature_extract.1} parent=0 // pred_fallthru
    _

</llo_original>
